<compile_context>
chip_gen: v5e
topology: v5e:2x2
jax: 0.10.0
libtpu: 0.0.40
codegen_flags: <defaults>
</compile_context>

<pallas_src>
import jax
import jax.numpy as jnp
from jax.experimental import pallas as pl
from jax.experimental.pallas import tpu as pltpu


# ----------------------------- small helpers --------------------------------

def _round_up(x, m):
    return ((x + m - 1) // m) * m


def _cdiv(a, b):
    return -(-a // b)


def _pad_to(a, shape):
    pads = [(0, s - d) for d, s in zip(a.shape, shape)]
    return jnp.pad(a, pads)


def _vmem_capacity_bytes():
    """Per-core VMEM capacity; conservative (v7x) fallback if the query fails."""
    try:
        return int(pltpu.get_tpu_info().vmem_capacity_bytes)
    except Exception:  # pragma: no cover
        return 64 * 1024 * 1024


def _pick_row_tile(n, per_row_bytes, resident_bytes, vmem_cap):
    """Pick the node-row tile TM (multiple of 8) and the padded row count.

    Budget: ~70% of per-core VMEM minus the resident (single-buffered) operands,
    divided by the per-row footprint (double-buffered A/H/out blocks + f32
    intermediates).  Always produce >= 2 grid steps when N allows it so v7x's two
    TensorCores both get work and the A DMA overlaps compute.
    """
    n8 = _round_up(n, 8)
    budget = int(vmem_cap * 0.70) - resident_bytes
    if budget <= 8 * per_row_bytes:
        tm_budget = 8
    else:
        tm_budget = (budget // per_row_bytes) // 8 * 8
    tm_budget = max(8, min(tm_budget, 2048, n8))
    min_grid = 2 if n8 >= 16 else 1
    grid = max(min_grid, _cdiv(n8, tm_budget))
    tm = _round_up(_cdiv(n8, grid), 8)
    return tm, tm * grid


# ------------------------------- the kernels ---------------------------------

def _finish_gates(g, h, w2_ref, wh2_ref, out_ref):
    """Shared gate/GRU math.  g: (TM, 3*Fo_p) f32 pre-activations, h: (TM, Fo_p) f32."""
    fo = out_ref.shape[-1]
    h_bf = h.astype(jnp.bfloat16)

    # Stacked H-side matmul for z and r:  g2 = H @ [Wz2 | Wr2]
    g2 = jnp.dot(h_bf, w2_ref[...], preferred_element_type=jnp.float32)

    z = jax.nn.sigmoid(g[:, :fo] + g2[:, :fo])
    r = jax.nn.sigmoid(g[:, fo:2 * fo] + g2[:, fo:])

    hr = (h * r).astype(jnp.bfloat16)
    h_tilde = jnp.tanh(
        g[:, 2 * fo:]
        + jnp.dot(hr, wh2_ref[...], preferred_element_type=jnp.float32)
    )

    # GRU combine (f32 H, no hidden-state truncation): H' = Z*H + (1-Z)*H_tilde
    out_ref[...] = (z * h + (1.0 - z) * h_tilde).astype(out_ref.dtype)


def _tgcn_kernel_agg_first(a_ref, x_ref, h_ref, weff_ref, w2_ref, wh2_ref,
                           beff_ref, out_ref):
    """Fin_pad <= 3*Fo_pad:  g = (A_tile @ X) @ [Wz|Wr|Wh]_eff + b_eff."""
    ax = jnp.dot(a_ref[...], x_ref[...],
                 preferred_element_type=jnp.float32).astype(jnp.bfloat16)
    g = jnp.dot(ax, weff_ref[...], preferred_element_type=jnp.float32) + beff_ref[...]
    _finish_gates(g, h_ref[...], w2_ref, wh2_ref, out_ref)


def _tgcn_kernel_pregated(a_ref, xw_ref, h_ref, w2_ref, wh2_ref, beff_ref, out_ref):
    """Fin_pad > 3*Fo_pad:  XW = X @ W_eff precomputed; g = A_tile @ XW + b_eff."""
    g = jnp.dot(a_ref[...], xw_ref[...],
                preferred_element_type=jnp.float32) + beff_ref[...]
    _finish_gates(g, h_ref[...], w2_ref, wh2_ref, out_ref)


# ------------------------------- the wrapper ---------------------------------

def tgcn_forward(a_norm, x, h, params, *, out_dtype=jnp.float32):
    """Single-step TGCN forward.  a_norm: (N,N), x: (N,Fin), h: (N,Fo); f32 in/out.

    out_dtype=f32 by default so that the returned hidden state can be fed back
    over a rollout without truncation; pass bf16 to halve output writeback
    traffic if the caller keeps its own f32 state.
    """
    n, fin = x.shape
    fo = h.shape[1]

    f32, bf16 = jnp.float32, jnp.bfloat16
    fo_p = _round_up(fo, 128)                 # lane-dense gate width
    fin_p = _round_up(fin, 128)               # lane-dense input width
    n_col_p = _round_up(n, 128)               # A columns / X rows: lane alignment only

    # --- fold GraphConv weights into the gate weights (exact algebra, f32) ---
    wz_eff = params["wg_z"] @ params["wz1"]                       # (Fin, Fo)
    wr_eff = params["wg_r"] @ params["wr1"]
    wh_eff = params["wg_h"] @ params["wh1"]
    bz_eff = params["bg_z"] @ params["wz1"] + params["bz"]        # (1, Fo)
    br_eff = params["bg_r"] @ params["wr1"] + params["br"]
    bh_eff = params["bg_h"] @ params["wh1"] + params["bh"]

    w_eff_f32 = jnp.concatenate(
        [_pad_to(wz_eff, (fin, fo_p)),
         _pad_to(wr_eff, (fin, fo_p)),
         _pad_to(wh_eff, (fin, fo_p))], axis=1)                   # (Fin, 3*Fo_p)
    b_eff = jnp.concatenate(
        [_pad_to(bz_eff, (1, fo_p)),
         _pad_to(br_eff, (1, fo_p)),
         _pad_to(bh_eff, (1, fo_p))], axis=1).astype(f32)         # (1, 3*Fo_p)
    w2 = jnp.concatenate(
        [_pad_to(params["wz2"], (fo_p, fo_p)),
         _pad_to(params["wr2"], (fo_p, fo_p))], axis=1).astype(bf16)   # (Fo_p, 2*Fo_p)
    wh2 = _pad_to(params["wh2"], (fo_p, fo_p)).astype(bf16)       # (Fo_p, Fo_p)

    # Reorder association when the input width exceeds the stacked gate width.
    fused_xw = fin_p > 3 * fo_p

    # --- size the row tile from the actual VMEM capacity of this generation ---
    vmem_cap = _vmem_capacity_bytes()
    b16, b32 = 2, 4
    out_b = jnp.dtype(out_dtype).itemsize
    if fused_xw:
        resident = (n_col_p * 3 * fo_p + fo_p * 2 * fo_p + fo_p * fo_p) * b16 \
                   + 3 * fo_p * b32
        per_row = (2 * n_col_p * b16           # A panel, double-buffered bf16
                   + 2 * fo_p * b32            # H panel, double-buffered f32
                   + 2 * fo_p * out_b          # out panel, double-buffered
                   + 10 * fo_p * b32)          # g/g2/z/r/hr/h_tilde f32 temps
    else:
        resident = (n_col_p * fin_p + fin_p * 3 * fo_p
                    + fo_p * 2 * fo_p + fo_p * fo_p) * b16 + 3 * fo_p * b32
        per_row = (2 * n_col_p * b16
                   + 2 * fo_p * b32
                   + 2 * fo_p * out_b
                   + fin_p * (b32 + b16)       # ax f32 accumulator + bf16 copy
                   + 10 * fo_p * b32)
    tm, n_row_p = _pick_row_tile(n, per_row, resident, vmem_cap)
    vmem_limit = max(32 * 1024 * 1024, int(vmem_cap * 0.8))

    # --- pad + cast dynamic inputs ---
    a_p = _pad_to(a_norm, (n_row_p, n_col_p)).astype(bf16)
    h_p = _pad_to(h, (n_row_p, fo_p)).astype(f32)                 # f32 H (exact combine)
    if fused_xw:
        xw = x.astype(f32) @ w_eff_f32                            # (N, 3*Fo_p), f32
        xw_p = _pad_to(xw, (n_col_p, 3 * fo_p)).astype(bf16)
        kernel = _tgcn_kernel_pregated
        operands = (a_p, xw_p, h_p, w2, wh2, b_eff)
    else:
        x_p = _pad_to(x, (n_col_p, fin_p)).astype(bf16)
        w_eff = _pad_to(w_eff_f32, (fin_p, 3 * fo_p)).astype(bf16)
        kernel = _tgcn_kernel_agg_first
        operands = (a_p, x_p, h_p, w_eff, w2, wh2, b_eff)

    grid = (n_row_p // tm,)
    row = lambda i: (i, 0)
    const = lambda i: (0, 0)

    def build_specs(use_single_buffer_residents):
        res_kw = (dict(pipeline_mode=pl.Buffered(1))
                  if use_single_buffer_residents else {})
        if fused_xw:
            in_specs = [
                pl.BlockSpec((tm, n_col_p), row),                          # A panel
                pl.BlockSpec((n_col_p, 3 * fo_p), const, **res_kw),        # XW (resident)
                pl.BlockSpec((tm, fo_p), row),                             # H panel (f32)
                pl.BlockSpec((fo_p, 2 * fo_p), const, **res_kw),           # [Wz2|Wr2]
                pl.BlockSpec((fo_p, fo_p), const, **res_kw),               # Wh2
                pl.BlockSpec((1, 3 * fo_p), const, **res_kw),              # b_eff
            ]
        else:
            in_specs = [
                pl.BlockSpec((tm, n_col_p), row),                          # A panel
                pl.BlockSpec((n_col_p, fin_p), const, **res_kw),           # X (resident)
                pl.BlockSpec((tm, fo_p), row),                             # H panel (f32)
                pl.BlockSpec((fin_p, 3 * fo_p), const, **res_kw),          # stacked W_eff
                pl.BlockSpec((fo_p, 2 * fo_p), const, **res_kw),           # [Wz2|Wr2]
                pl.BlockSpec((fo_p, fo_p), const, **res_kw),               # Wh2
                pl.BlockSpec((1, 3 * fo_p), const, **res_kw),              # b_eff
            ]
        out_spec = pl.BlockSpec((tm, fo_p), row)
        return in_specs, out_spec

    def run(use_single_buffer_residents):
        in_specs, out_spec = build_specs(use_single_buffer_residents)
        out = pl.pallas_call(
            kernel,
            out_shape=jax.ShapeDtypeStruct((n_row_p, fo_p), out_dtype),
            grid=grid,
            in_specs=in_specs,
            out_specs=out_spec,
            compiler_params=pltpu.CompilerParams(
                dimension_semantics=("parallel",),
                vmem_limit_bytes=vmem_limit,
            ),
        )(*operands)
        return jax.block_until_ready(out)

    try:
        out = run(True)
    except Exception:
        # Older jax without BlockSpec pipeline_mode / Buffered(1): default buffering.
        out = run(False)

    return out[:n, :fo]


# ----------------------- params / graph / reference --------------------------

def make_params(key, in_channels, out_channels):
    """Synthetic parameters matching the torch module's shapes.

    torch Linear(2*Fo, Fo) weight (Fo, 2*Fo) applied as x @ W.T + b; stored here
    as the transposed split halves W.T = [[W1],[W2]], each (Fo, Fo).
    GraphConv weight (Fin, Fo), bias stored as (1, Fo).
    """
    ks = jax.random.split(key, 15)
    s_in = 1.0 / jnp.sqrt(in_channels)
    s_2o = 1.0 / jnp.sqrt(2.0 * out_channels)
    u = lambda k, shape, s: jax.random.uniform(k, shape, jnp.float32, -s, s)
    return {
        "wg_z": u(ks[0], (in_channels, out_channels), s_in),
        "wg_r": u(ks[1], (in_channels, out_channels), s_in),
        "wg_h": u(ks[2], (in_channels, out_channels), s_in),
        "bg_z": u(ks[3], (1, out_channels), s_in),
        "bg_r": u(ks[4], (1, out_channels), s_in),
        "bg_h": u(ks[5], (1, out_channels), s_in),
        "wz1": u(ks[6], (out_channels, out_channels), s_2o),
        "wz2": u(ks[7], (out_channels, out_channels), s_2o),
        "bz":  u(ks[8], (1, out_channels), s_2o),
        "wr1": u(ks[9], (out_channels, out_channels), s_2o),
        "wr2": u(ks[10], (out_channels, out_channels), s_2o),
        "br":  u(ks[11], (1, out_channels), s_2o),
        "wh1": u(ks[12], (out_channels, out_channels), s_2o),
        "wh2": u(ks[13], (out_channels, out_channels), s_2o),
        "bh":  u(ks[14], (1, out_channels), s_2o),
    }


def make_normalized_adjacency(key, n):
    """Random weighted graph with self loops, symmetric D^{-1/2} (A*w) D^{-1/2} norm.

    Equivalent to DGL GraphConv(norm='both') with edge weights, materialised densely.
    """
    # TODO(synk): for large/sparse graphs, switch to a blocked-sparse formulation
    # (scalar-prefetched block indices) instead of a dense N^2 adjacency.
    k1, k2 = jax.random.split(key)
    mask = (jax.random.uniform(k1, (n, n)) < 0.3).astype(jnp.float32)
    mask = jnp.maximum(mask, jnp.eye(n, dtype=jnp.float32))       # ensure self loops
    w = jax.random.uniform(k2, (n, n), jnp.float32, 0.5, 1.5)     # edge weights
    a = mask * w
    deg = jnp.sum(a, axis=1)
    d_inv_sqrt = jnp.where(deg > 0, 1.0 / jnp.sqrt(deg), 0.0)
    return d_inv_sqrt[:, None] * a * d_inv_sqrt[None, :]


def tgcn_reference(a_norm, x, h, p):
    """Plain-JAX f32 reference (un-fused formulation) for correctness checking."""
    ax = a_norm @ x
    hz = ax @ p["wg_z"] + p["bg_z"]
    hr = ax @ p["wg_r"] + p["bg_r"]
    hh = ax @ p["wg_h"] + p["bg_h"]
    z = jax.nn.sigmoid(hz @ p["wz1"] + h @ p["wz2"] + p["bz"])
    r = jax.nn.sigmoid(hr @ p["wr1"] + h @ p["wr2"] + p["br"])
    ht = jnp.tanh(hh @ p["wh1"] + (h * r) @ p["wh2"] + p["bh"])
    return z * h + (1.0 - z) * ht


# ----------------------------------- main -------------------------------------

if __name__ == "__main__":
    num_nodes = 16
    in_channels = 8
    out_channels = 16

    key = jax.random.PRNGKey(0)
    k_graph, k_x, k_h, k_p, k_x2, k_p2 = jax.random.split(key, 6)

    a_norm = make_normalized_adjacency(k_graph, num_nodes)
    x = jax.random.normal(k_x, (num_nodes, in_channels), jnp.float32)
    params = make_params(k_p, in_channels, out_channels)

    # Case 1: H=None path in the torch module -> zeros hidden state.
    h0 = jnp.zeros((num_nodes, out_channels), jnp.float32)
    out0 = jax.block_until_ready(tgcn_forward(a_norm, x, h0, params))
    ref0 = tgcn_reference(a_norm, x, h0, params)
    assert out0.shape == (num_nodes, out_channels)
    assert jnp.allclose(out0, ref0, atol=2e-2, rtol=2e-2), \
        f"zero-H mismatch: max err {jnp.max(jnp.abs(out0 - ref0))}"

    # Case 2: random hidden state (exercises z*H and the r-gated (H*R)@Wh2 path).
    h1 = jax.random.normal(k_h, (num_nodes, out_channels), jnp.float32)
    out1 = jax.block_until_ready(tgcn_forward(a_norm, x, h1, params))
    ref1 = tgcn_reference(a_norm, x, h1, params)
    assert jnp.allclose(out1, ref1, atol=2e-2, rtol=2e-2), \
        f"random-H mismatch: max err {jnp.max(jnp.abs(out1 - ref1))}"

    # Case 3: wide-input config (Fin_pad > 3*Fo_pad) -> pre-gated A @ (X @ W_eff) path.
    in_wide = 512
    x2 = jax.random.normal(k_x2, (num_nodes, in_wide), jnp.float32)
    params2 = make_params(k_p2, in_wide, out_channels)
    out2 = jax.block_until_ready(tgcn_forward(a_norm, x2, h1, params2))
    ref2 = tgcn_reference(a_norm, x2, h1, params2)
    assert out2.shape == (num_nodes, out_channels)
    assert jnp.allclose(out2, ref2, atol=2e-2, rtol=2e-2), \
        f"wide-input mismatch: max err {jnp.max(jnp.abs(out2 - ref2))}"

    print("KERNEL_OK")
</pallas_src>

<mosaic_0001>
module attributes {stable_mosaic.version = 11 : i64} {
  func.func @_tgcn_kernel_agg_first(%arg0: i32, %arg1: memref<8x128xbf16, #tpu.memory_space<vmem>>, %arg2: memref<128x128xbf16, #tpu.memory_space<vmem>>, %arg3: memref<8x128xf32, #tpu.memory_space<vmem>>, %arg4: memref<128x384xbf16, #tpu.memory_space<vmem>>, %arg5: memref<128x256xbf16, #tpu.memory_space<vmem>>, %arg6: memref<128x128xbf16, #tpu.memory_space<vmem>>, %arg7: memref<1x384xf32, #tpu.memory_space<vmem>>, %arg8: memref<8x128xf32, #tpu.memory_space<vmem>>) attributes {dimension_semantics = [#tpu.dimension_semantics<parallel>], iteration_bounds = array<i64: 2>, scalar_prefetch = 0 : i64, scratch_operands = 0 : i64, tpu.core_type = #tpu.core_type<tc>, window_params = [{transform_indices = @transform_0, window_bounds = array<i64: 8, 128>}, {pipeline_mode = #tpu.pipeline_mode<synchronous>, transform_indices = @transform_1, window_bounds = array<i64: 128, 128>}, {transform_indices = @transform_2, window_bounds = array<i64: 8, 128>}, {pipeline_mode = #tpu.pipeline_mode<synchronous>, transform_indices = @transform_3, window_bounds = array<i64: 128, 384>}, {pipeline_mode = #tpu.pipeline_mode<synchronous>, transform_indices = @transform_4, window_bounds = array<i64: 128, 256>}, {pipeline_mode = #tpu.pipeline_mode<synchronous>, transform_indices = @transform_5, window_bounds = array<i64: 128, 128>}, {pipeline_mode = #tpu.pipeline_mode<synchronous>, transform_indices = @transform_6, window_bounds = array<i64: 1, 384>}, {transform_indices = @transform_7, window_bounds = array<i64: 8, 128>}]} {
    %c0 = arith.constant 0 : index
    %c0_0 = arith.constant 0 : index
    %0 = vector.load %arg1[%c0, %c0_0] : memref<8x128xbf16, #tpu.memory_space<vmem>>, vector<8x128xbf16>
    %c0_1 = arith.constant 0 : index
    %c0_2 = arith.constant 0 : index
    %1 = vector.load %arg2[%c0_1, %c0_2] : memref<128x128xbf16, #tpu.memory_space<vmem>>, vector<128x128xbf16>
    %cst = arith.constant dense<0.000000e+00> : vector<8x128xf32>
    %2 = tpu.matmul %0, %1, %cst {dimension_numbers = #tpu.dot_dimension_numbers<[1], [0], [0], [1], [0, 0, 1, 1], [], []>} : vector<8x128xbf16>, vector<128x128xbf16>, vector<8x128xf32> -> vector<8x128xf32>
    %3 = arith.truncf %2 : vector<8x128xf32> to vector<8x128xbf16>
    %c0_3 = arith.constant 0 : index
    %c0_4 = arith.constant 0 : index
    %4 = vector.load %arg4[%c0_3, %c0_4] : memref<128x384xbf16, #tpu.memory_space<vmem>>, vector<128x384xbf16>
    %cst_5 = arith.constant dense<0.000000e+00> : vector<8x384xf32>
    %5 = tpu.matmul %3, %4, %cst_5 {dimension_numbers = #tpu.dot_dimension_numbers<[1], [0], [0], [1], [0, 0, 1, 1], [], []>} : vector<8x128xbf16>, vector<128x384xbf16>, vector<8x384xf32> -> vector<8x384xf32>
    %c0_6 = arith.constant 0 : index
    %c0_7 = arith.constant 0 : index
    %6 = vector.load %arg7[%c0_6, %c0_7] : memref<1x384xf32, #tpu.memory_space<vmem>>, vector<1x384xf32>
    %7 = vector.broadcast %6 : vector<1x384xf32> to vector<8x384xf32>
    %8 = arith.addf %5, %7 : vector<8x384xf32>
    %c0_8 = arith.constant 0 : index
    %c0_9 = arith.constant 0 : index
    %9 = vector.load %arg3[%c0_8, %c0_9] : memref<8x128xf32, #tpu.memory_space<vmem>>, vector<8x128xf32>
    %10 = arith.truncf %9 : vector<8x128xf32> to vector<8x128xbf16>
    %c0_10 = arith.constant 0 : index
    %c0_11 = arith.constant 0 : index
    %11 = vector.load %arg5[%c0_10, %c0_11] : memref<128x256xbf16, #tpu.memory_space<vmem>>, vector<128x256xbf16>
    %cst_12 = arith.constant dense<0.000000e+00> : vector<8x256xf32>
    %12 = tpu.matmul %10, %11, %cst_12 {dimension_numbers = #tpu.dot_dimension_numbers<[1], [0], [0], [1], [0, 0, 1, 1], [], []>} : vector<8x128xbf16>, vector<128x256xbf16>, vector<8x256xf32> -> vector<8x256xf32>
    %13 = vector.extract_strided_slice %8 {offsets = [0, 0], sizes = [8, 128], strides = [1, 1]} : vector<8x384xf32> to vector<8x128xf32>
    %14 = vector.extract_strided_slice %12 {offsets = [0, 0], sizes = [8, 128], strides = [1, 1]} : vector<8x256xf32> to vector<8x128xf32>
    %15 = arith.addf %13, %14 : vector<8x128xf32>
    %16 = arith.negf %15 : vector<8x128xf32>
    %17 = math.exp %16 : vector<8x128xf32>
    %cst_13 = arith.constant 1.000000e+00 : f32
    %18 = vector.broadcast %cst_13 : f32 to vector<8x128xf32>
    %19 = arith.addf %18, %17 : vector<8x128xf32>
    %20 = arith.divf %18, %19 : vector<8x128xf32>
    %21 = vector.extract_strided_slice %8 {offsets = [0, 128], sizes = [8, 128], strides = [1, 1]} : vector<8x384xf32> to vector<8x128xf32>
    %22 = vector.extract_strided_slice %12 {offsets = [0, 128], sizes = [8, 128], strides = [1, 1]} : vector<8x256xf32> to vector<8x128xf32>
    %23 = arith.addf %21, %22 : vector<8x128xf32>
    %24 = arith.negf %23 : vector<8x128xf32>
    %25 = math.exp %24 : vector<8x128xf32>
    %cst_14 = arith.constant 1.000000e+00 : f32
    %26 = vector.broadcast %cst_14 : f32 to vector<8x128xf32>
    %27 = arith.addf %26, %25 : vector<8x128xf32>
    %28 = arith.divf %26, %27 : vector<8x128xf32>
    %29 = arith.mulf %9, %28 : vector<8x128xf32>
    %30 = arith.truncf %29 : vector<8x128xf32> to vector<8x128xbf16>
    %31 = vector.extract_strided_slice %8 {offsets = [0, 256], sizes = [8, 128], strides = [1, 1]} : vector<8x384xf32> to vector<8x128xf32>
    %c0_15 = arith.constant 0 : index
    %c0_16 = arith.constant 0 : index
    %32 = vector.load %arg6[%c0_15, %c0_16] : memref<128x128xbf16, #tpu.memory_space<vmem>>, vector<128x128xbf16>
    %cst_17 = arith.constant dense<0.000000e+00> : vector<8x128xf32>
    %33 = tpu.matmul %30, %32, %cst_17 {dimension_numbers = #tpu.dot_dimension_numbers<[1], [0], [0], [1], [0, 0, 1, 1], [], []>} : vector<8x128xbf16>, vector<128x128xbf16>, vector<8x128xf32> -> vector<8x128xf32>
    %34 = arith.addf %31, %33 : vector<8x128xf32>
    %35 = math.tanh %34 : vector<8x128xf32>
    %36 = arith.mulf %20, %9 : vector<8x128xf32>
    %cst_18 = arith.constant 1.000000e+00 : f32
    %37 = vector.broadcast %cst_18 : f32 to vector<8x128xf32>
    %38 = arith.subf %37, %20 : vector<8x128xf32>
    %39 = arith.mulf %38, %35 : vector<8x128xf32>
    %40 = arith.addf %36, %39 : vector<8x128xf32>
    %c0_19 = arith.constant 0 : index
    %c0_20 = arith.constant 0 : index
    %41 = vector.load %arg8[%c0_19, %c0_20] : memref<8x128xf32, #tpu.memory_space<vmem>>, vector<8x128xf32>
    tpu.vector_store %arg8[%c0_19, %c0_20], %40 {strides = array<i32>} : memref<8x128xf32, #tpu.memory_space<vmem>>, vector<8x128xf32>,
    return
  }
  func.func @transform_0(%arg0: i32) -> (i32, i32) {
    %c0_i32 = arith.constant 0 : i32
    %c0_i32_0 = arith.constant 0 : i32
    return %arg0, %c0_i32 : i32, i32
  }
  func.func @transform_1(%arg0: i32) -> (i32, i32) {
    %c0_i32 = arith.constant 0 : i32
    %c0_i32_0 = arith.constant 0 : i32
    %c0_i32_1 = arith.constant 0 : i32
    return %c0_i32, %c0_i32_0 : i32, i32
  }
  func.func @transform_2(%arg0: i32) -> (i32, i32) {
    %c0_i32 = arith.constant 0 : i32
    %c0_i32_0 = arith.constant 0 : i32
    return %arg0, %c0_i32 : i32, i32
  }
  func.func @transform_3(%arg0: i32) -> (i32, i32) {
    %c0_i32 = arith.constant 0 : i32
    %c0_i32_0 = arith.constant 0 : i32
    %c0_i32_1 = arith.constant 0 : i32
    return %c0_i32, %c0_i32_0 : i32, i32
  }
  func.func @transform_4(%arg0: i32) -> (i32, i32) {
    %c0_i32 = arith.constant 0 : i32
    %c0_i32_0 = arith.constant 0 : i32
    %c0_i32_1 = arith.constant 0 : i32
    return %c0_i32, %c0_i32_0 : i32, i32
  }
  func.func @transform_5(%arg0: i32) -> (i32, i32) {
    %c0_i32 = arith.constant 0 : i32
    %c0_i32_0 = arith.constant 0 : i32
    %c0_i32_1 = arith.constant 0 : i32
    return %c0_i32, %c0_i32_0 : i32, i32
  }
  func.func @transform_6(%arg0: i32) -> (i32, i32) {
    %c0_i32 = arith.constant 0 : i32
    %c0_i32_0 = arith.constant 0 : i32
    %c0_i32_1 = arith.constant 0 : i32
    return %c0_i32, %c0_i32_0 : i32, i32
  }
  func.func @transform_7(%arg0: i32) -> (i32, i32) {
    %c0_i32 = arith.constant 0 : i32
    %c0_i32_0 = arith.constant 0 : i32
    return %arg0, %c0_i32 : i32, i32
  }
}

module attributes {stable_mosaic.version = 11 : i64} {
  func.func @_tgcn_kernel_agg_first(%arg0: i32, %arg1: memref<8x128xbf16, #tpu.memory_space<vmem>>, %arg2: memref<128x128xbf16, #tpu.memory_space<vmem>>, %arg3: memref<8x128xf32, #tpu.memory_space<vmem>>, %arg4: memref<128x384xbf16, #tpu.memory_space<vmem>>, %arg5: memref<128x256xbf16, #tpu.memory_space<vmem>>, %arg6: memref<128x128xbf16, #tpu.memory_space<vmem>>, %arg7: memref<1x384xf32, #tpu.memory_space<vmem>>, %arg8: memref<8x128xf32, #tpu.memory_space<vmem>>) attributes {dimension_semantics = [#tpu.dimension_semantics<parallel>], iteration_bounds = array<i64: 2>, scalar_prefetch = 0 : i64, scratch_operands = 0 : i64, tpu.core_type = #tpu.core_type<tc>, window_params = [{transform_indices = @transform_0, window_bounds = array<i64: 8, 128>}, {pipeline_mode = #tpu.pipeline_mode<synchronous>, transform_indices = @transform_1, window_bounds = array<i64: 128, 128>}, {transform_indices = @transform_2, window_bounds = array<i64: 8, 128>}, {pipeline_mode = #tpu.pipeline_mode<synchronous>, transform_indices = @transform_3, window_bounds = array<i64: 128, 384>}, {pipeline_mode = #tpu.pipeline_mode<synchronous>, transform_indices = @transform_4, window_bounds = array<i64: 128, 256>}, {pipeline_mode = #tpu.pipeline_mode<synchronous>, transform_indices = @transform_5, window_bounds = array<i64: 128, 128>}, {pipeline_mode = #tpu.pipeline_mode<synchronous>, transform_indices = @transform_6, window_bounds = array<i64: 1, 384>}, {transform_indices = @transform_7, window_bounds = array<i64: 8, 128>}]} {
    %c0 = arith.constant 0 : index
    %c0_0 = arith.constant 0 : index
    %0 = vector.load %arg1[%c0, %c0_0] : memref<8x128xbf16, #tpu.memory_space<vmem>>, vector<8x128xbf16>
    %c0_1 = arith.constant 0 : index
    %c0_2 = arith.constant 0 : index
    %1 = vector.load %arg2[%c0_1, %c0_2] : memref<128x128xbf16, #tpu.memory_space<vmem>>, vector<128x128xbf16>
    %cst = arith.constant dense<0.000000e+00> : vector<8x128xf32>
    %2 = tpu.matmul %0, %1, %cst {dimension_numbers = #tpu.dot_dimension_numbers<[1], [0], [0], [1], [0, 0, 1, 1], [], []>} : vector<8x128xbf16>, vector<128x128xbf16>, vector<8x128xf32> -> vector<8x128xf32>
    %3 = arith.truncf %2 : vector<8x128xf32> to vector<8x128xbf16>
    %c0_3 = arith.constant 0 : index
    %c0_4 = arith.constant 0 : index
    %4 = vector.load %arg4[%c0_3, %c0_4] : memref<128x384xbf16, #tpu.memory_space<vmem>>, vector<128x384xbf16>
    %cst_5 = arith.constant dense<0.000000e+00> : vector<8x384xf32>
    %5 = tpu.matmul %3, %4, %cst_5 {dimension_numbers = #tpu.dot_dimension_numbers<[1], [0], [0], [1], [0, 0, 1, 1], [], []>} : vector<8x128xbf16>, vector<128x384xbf16>, vector<8x384xf32> -> vector<8x384xf32>
    %c0_6 = arith.constant 0 : index
    %c0_7 = arith.constant 0 : index
    %6 = vector.load %arg7[%c0_6, %c0_7] : memref<1x384xf32, #tpu.memory_space<vmem>>, vector<1x384xf32>
    %7 = vector.broadcast %6 : vector<1x384xf32> to vector<8x384xf32>
    %8 = arith.addf %5, %7 : vector<8x384xf32>
    %c0_8 = arith.constant 0 : index
    %c0_9 = arith.constant 0 : index
    %9 = vector.load %arg3[%c0_8, %c0_9] : memref<8x128xf32, #tpu.memory_space<vmem>>, vector<8x128xf32>
    %10 = arith.truncf %9 : vector<8x128xf32> to vector<8x128xbf16>
    %c0_10 = arith.constant 0 : index
    %c0_11 = arith.constant 0 : index
    %11 = vector.load %arg5[%c0_10, %c0_11] : memref<128x256xbf16, #tpu.memory_space<vmem>>, vector<128x256xbf16>
    %cst_12 = arith.constant dense<0.000000e+00> : vector<8x256xf32>
    %12 = tpu.matmul %10, %11, %cst_12 {dimension_numbers = #tpu.dot_dimension_numbers<[1], [0], [0], [1], [0, 0, 1, 1], [], []>} : vector<8x128xbf16>, vector<128x256xbf16>, vector<8x256xf32> -> vector<8x256xf32>
    %13 = vector.extract_strided_slice %8 {offsets = [0, 0], sizes = [8, 128], strides = [1, 1]} : vector<8x384xf32> to vector<8x128xf32>
    %14 = vector.extract_strided_slice %12 {offsets = [0, 0], sizes = [8, 128], strides = [1, 1]} : vector<8x256xf32> to vector<8x128xf32>
    %15 = arith.addf %13, %14 : vector<8x128xf32>
    %16 = arith.negf %15 : vector<8x128xf32>
    %17 = math.exp %16 : vector<8x128xf32>
    %cst_13 = arith.constant 1.000000e+00 : f32
    %18 = vector.broadcast %cst_13 : f32 to vector<8x128xf32>
    %19 = arith.addf %18, %17 : vector<8x128xf32>
    %20 = arith.divf %18, %19 : vector<8x128xf32>
    %21 = vector.extract_strided_slice %8 {offsets = [0, 128], sizes = [8, 128], strides = [1, 1]} : vector<8x384xf32> to vector<8x128xf32>
    %22 = vector.extract_strided_slice %12 {offsets = [0, 128], sizes = [8, 128], strides = [1, 1]} : vector<8x256xf32> to vector<8x128xf32>
    %23 = arith.addf %21, %22 : vector<8x128xf32>
    %24 = arith.negf %23 : vector<8x128xf32>
    %25 = math.exp %24 : vector<8x128xf32>
    %cst_14 = arith.constant 1.000000e+00 : f32
    %26 = vector.broadcast %cst_14 : f32 to vector<8x128xf32>
    %27 = arith.addf %26, %25 : vector<8x128xf32>
    %28 = arith.divf %26, %27 : vector<8x128xf32>
    %29 = arith.mulf %9, %28 : vector<8x128xf32>
    %30 = arith.truncf %29 : vector<8x128xf32> to vector<8x128xbf16>
    %31 = vector.extract_strided_slice %8 {offsets = [0, 256], sizes = [8, 128], strides = [1, 1]} : vector<8x384xf32> to vector<8x128xf32>
    %c0_15 = arith.constant 0 : index
    %c0_16 = arith.constant 0 : index
    %32 = vector.load %arg6[%c0_15, %c0_16] : memref<128x128xbf16, #tpu.memory_space<vmem>>, vector<128x128xbf16>
    %cst_17 = arith.constant dense<0.000000e+00> : vector<8x128xf32>
    %33 = tpu.matmul %30, %32, %cst_17 {dimension_numbers = #tpu.dot_dimension_numbers<[1], [0], [0], [1], [0, 0, 1, 1], [], []>} : vector<8x128xbf16>, vector<128x128xbf16>, vector<8x128xf32> -> vector<8x128xf32>
    %34 = arith.addf %31, %33 : vector<8x128xf32>
    %35 = math.tanh %34 : vector<8x128xf32>
    %36 = arith.mulf %20, %9 : vector<8x128xf32>
    %cst_18 = arith.constant 1.000000e+00 : f32
    %37 = vector.broadcast %cst_18 : f32 to vector<8x128xf32>
    %38 = arith.subf %37, %20 : vector<8x128xf32>
    %39 = arith.mulf %38, %35 : vector<8x128xf32>
    %40 = arith.addf %36, %39 : vector<8x128xf32>
    %c0_19 = arith.constant 0 : index
    %c0_20 = arith.constant 0 : index
    %41 = vector.load %arg8[%c0_19, %c0_20] : memref<8x128xf32, #tpu.memory_space<vmem>>, vector<8x128xf32>
    tpu.vector_store %arg8[%c0_19, %c0_20], %40 {strides = array<i32>} : memref<8x128xf32, #tpu.memory_space<vmem>>, vector<8x128xf32>,
    return
  }
  func.func @transform_0(%arg0: i32) -> (i32, i32) {
    %c0_i32 = arith.constant 0 : i32
    %c0_i32_0 = arith.constant 0 : i32
    return %arg0, %c0_i32 : i32, i32
  }
  func.func @transform_1(%arg0: i32) -> (i32, i32) {
    %c0_i32 = arith.constant 0 : i32
    %c0_i32_0 = arith.constant 0 : i32
    %c0_i32_1 = arith.constant 0 : i32
    return %c0_i32, %c0_i32_0 : i32, i32
  }
  func.func @transform_2(%arg0: i32) -> (i32, i32) {
    %c0_i32 = arith.constant 0 : i32
    %c0_i32_0 = arith.constant 0 : i32
    return %arg0, %c0_i32 : i32, i32
  }
  func.func @transform_3(%arg0: i32) -> (i32, i32) {
    %c0_i32 = arith.constant 0 : i32
    %c0_i32_0 = arith.constant 0 : i32
    %c0_i32_1 = arith.constant 0 : i32
    return %c0_i32, %c0_i32_0 : i32, i32
  }
  func.func @transform_4(%arg0: i32) -> (i32, i32) {
    %c0_i32 = arith.constant 0 : i32
    %c0_i32_0 = arith.constant 0 : i32
    %c0_i32_1 = arith.constant 0 : i32
    return %c0_i32, %c0_i32_0 : i32, i32
  }
  func.func @transform_5(%arg0: i32) -> (i32, i32) {
    %c0_i32 = arith.constant 0 : i32
    %c0_i32_0 = arith.constant 0 : i32
    %c0_i32_1 = arith.constant 0 : i32
    return %c0_i32, %c0_i32_0 : i32, i32
  }
  func.func @transform_6(%arg0: i32) -> (i32, i32) {
    %c0_i32 = arith.constant 0 : i32
    %c0_i32_0 = arith.constant 0 : i32
    %c0_i32_1 = arith.constant 0 : i32
    return %c0_i32, %c0_i32_0 : i32, i32
  }
  func.func @transform_7(%arg0: i32) -> (i32, i32) {
    %c0_i32 = arith.constant 0 : i32
    %c0_i32_0 = arith.constant 0 : i32
    return %arg0, %c0_i32 : i32, i32
  }
}

</mosaic_0001>

<llo_original>
// kernel: tpu_custom_call.1
$region0: #{tpu_custom_call.1}
  #allocation0 [shape = 'u32[]', space=smem, size = 0x4, offset = 0x4, fixed_abs, tag = 'smem constant byte address 0x4 - core index']
  #allocation1 [shape = 'u32[72,128]{1,0:T(1,128)}', space=vmem, size = 0x9000, scoped, tag = 'internal scratch']
  %s0 = inlined_call_operand.hbm [shape: bf16[16,128], index: 0, kind: input, shape index: {}]
  %s1 = inlined_call_operand.hbm [shape: bf16[128,128], index: 1, kind: input, shape index: {}]
  %s2 = inlined_call_operand.hbm [shape: f32[16,128], index: 2, kind: input, shape index: {}]
  %s3 = inlined_call_operand.hbm [shape: bf16[128,384], index: 3, kind: input, shape index: {}]
  %s4 = inlined_call_operand.hbm [shape: bf16[128,256], index: 4, kind: input, shape index: {}]
  %s5 = inlined_call_operand.hbm [shape: bf16[128,128], index: 5, kind: input, shape index: {}]
  %s6 = inlined_call_operand.vmem [shape: f32[1,384], index: 6, kind: input, shape index: {}]
  %s7 = inlined_call_operand.hbm [shape: f32[16,128], index: 7, kind: output, shape index: {}]
  %s8 = sld [smem:[#allocation0]]
  $region85: #{tpu_custom_call.1} parent=0
    _
  %s10 = ssub.s32 1, %s8
  %s11 = scalar_select 0, %s10, %s8
  $region1: #{tpu_custom_call.1} parent=0
    #allocation2 [shape = 'u8[4096]{0}', space=vmem, size = 0x1000, scoped, tag = 'input window, operand 0']
    #allocation3 [shape = 's32[2]{0}', space=sflag, size = 0x8, scoped, tag = 'scoped memory for tpu_custom_call.1']
    #allocation4 [shape = 's32[2]{0}', space=sflag, size = 0x8, scoped, tag = 'scoped memory for tpu_custom_call.1']
    #allocation5 [shape = 'u8[32768]{0}', space=vmem, size = 0x8000, scoped, tag = 'input window, operand 1, single buffered']
    #allocation6 [shape = 's32[1]{0}', space=sflag, size = 0x4, scoped, tag = 'scoped memory for tpu_custom_call.1']
    #allocation7 [shape = 'u8[8192]{0}', space=vmem, size = 0x2000, scoped, tag = 'input window, operand 2']
    #allocation8 [shape = 'u8[98304]{0}', space=vmem, size = 0x18000, scoped, tag = 'input window, operand 3, single buffered']
    #allocation9 [shape = 'u8[65536]{0}', space=vmem, size = 0x10000, scoped, tag = 'input window, operand 4, single buffered']
    #allocation10 [shape = 's32[1]{0}', space=sflag, size = 0x4, scoped, tag = 'scoped memory for tpu_custom_call.1']
    #allocation11 [shape = 'u8[32768]{0}', space=vmem, size = 0x8000, scoped, tag = 'input window, operand 5, single buffered']
    #allocation12 [shape = 'u8[8192]{0}', space=vmem, size = 0x2000, scoped, tag = 'output window, operand 0']
    %12 = vsyncpa [#allocation3], 0
    %s13 = scalar_lea.sflag [#allocation3], 1
    %14 = vsyncpa %s13, 0
    %15 = vsyncpa [#allocation6], 0
    %16 = vsyncpa [#allocation10], 0
    %17 = vsyncpa [#allocation4], 0
    %s18 = scalar_lea.sflag [#allocation4], 1
    %19 = vsyncpa %s18, 0
    loop: start=0, step=1, limit=4
    $region2: #{tpu_custom_call.1} parent=1 // loop_pre_header
      _
    $region3: #{tpu_custom_call.1} parent=1 // loop_header
      %s21 = sphi 0, %s25
      %p22 = scmp.ge.s32.totalorder %s21, 4
      %s31 = sphi 0, %s33
      %s34 = sphi 0, %s31
      %s35 = sphi 0, %s34
      %s51 = sphi 0, %s35
      %s55 = sphi 0, %s55
      %s57 = sphi 0, %s55
      %s58 = sphi 0, %s57
      %s72 = sphi 0, %s58
      %s78 = sphi 0, %s80
      %s81 = sphi 0, %s78
      %s82 = sphi 0, %s81
      %s98 = sphi 0, %s82
      %s102 = sphi 0, %s102
      %s104 = sphi 0, %s102
      %s105 = sphi 0, %s104
      %s119 = sphi 0, %s105
      %s123 = sphi 0, %s123
      %s125 = sphi 0, %s123
      %s126 = sphi 0, %s125
      %s140 = sphi 0, %s126
      %s144 = sphi 0, %s144
      %s146 = sphi 0, %s144
      %s147 = sphi 0, %s146
      %s161 = sphi 0, %s147
      %s165 = sphi 0, %s165
      %s167 = sphi 0, %s165
      %s168 = sphi 0, %s167
      %s182 = sphi 0, %s168
      %s188 = sphi 0, %s190
      %s191 = sphi 0, %s188
      %s192 = sphi 0, %s191
      %s208 = sphi 0, %s192
    $region4: #{tpu_custom_call.1} parent=1 // loop_header_branch
      %24 = sbr.rel (%p22) target = $region8
    $region5: #{tpu_custom_call.1} parent=1 // loop_body
      %s26 = ssub.s32 %s21, 1
      %s27 = ssub.s32 %s21, 2
      %s28 = sadd.s32 %s21, 1
      %s29 = ssub.s32 %s21, %s28
      %p30 = scmp.eq.s32.totalorder %s29, 0
      %s32 = sadd.s32 %s31, 1
      %s33 = scalar_select %p30, %s31, %s32
      %p36 = pneg %p30
      %p37 = scmp.eq.s32.totalorder %s21, 1
      %p38 = por %p36, %p37
      %p39 = scmp.ne.s32.totalorder %s31, %s34
      %p40 = scmp.eq.s32.totalorder %s21, 0
      %p41 = por %p39, %p40
      %p42 = scmp.ne.s32.totalorder %s31, %s34
      %p43 = scmp.eq.s32.totalorder %s26, 1
      %p44 = por %p42, %p43
      %p45 = scmp.ne.s32.totalorder %s34, %s35
      %p46 = scmp.eq.s32.totalorder %s26, 0
      %p47 = por %p45, %p46
      %p48 = scmp.ne.s32.totalorder %s34, %s35
      %p49 = scmp.eq.s32.totalorder %s27, 1
      %p50 = por %p48, %p49
      %p52 = scmp.ne.s32.totalorder %s35, %s51
      %p53 = scmp.eq.s32.totalorder %s27, 0
      %p54 = por %p52, %p53
      %s56 = sadd.s32 %s55, 1
      %p59 = scmp.eq.s32.totalorder %s21, 1
      %p60 = scmp.ne.s32.totalorder %s55, %s57
      %p61 = scmp.eq.s32.totalorder %s21, 0
      %p62 = por %p60, %p61
      %p63 = scmp.ne.s32.totalorder %s55, %s57
      %p64 = scmp.eq.s32.totalorder %s26, 1
      %p65 = por %p63, %p64
      %p66 = scmp.ne.s32.totalorder %s57, %s58
      %p67 = scmp.eq.s32.totalorder %s26, 0
      %p68 = por %p66, %p67
      %p69 = scmp.ne.s32.totalorder %s57, %s58
      %p70 = scmp.eq.s32.totalorder %s27, 1
      %p71 = por %p69, %p70
      %p73 = scmp.ne.s32.totalorder %s58, %s72
      %p74 = scmp.eq.s32.totalorder %s27, 0
      %p75 = por %p73, %p74
      %s76 = ssub.s32 %s21, %s28
      %p77 = scmp.eq.s32.totalorder %s76, 0
      %s79 = sadd.s32 %s78, 1
      %s80 = scalar_select %p77, %s78, %s79
      %p83 = pneg %p77
      %p84 = scmp.eq.s32.totalorder %s21, 1
      %p85 = por %p83, %p84
      %p86 = scmp.ne.s32.totalorder %s78, %s81
      %p87 = scmp.eq.s32.totalorder %s21, 0
      %p88 = por %p86, %p87
      %p89 = scmp.ne.s32.totalorder %s78, %s81
      %p90 = scmp.eq.s32.totalorder %s26, 1
      %p91 = por %p89, %p90
      %p92 = scmp.ne.s32.totalorder %s81, %s82
      %p93 = scmp.eq.s32.totalorder %s26, 0
      %p94 = por %p92, %p93
      %p95 = scmp.ne.s32.totalorder %s81, %s82
      %p96 = scmp.eq.s32.totalorder %s27, 1
      %p97 = por %p95, %p96
      %p99 = scmp.ne.s32.totalorder %s82, %s98
      %p100 = scmp.eq.s32.totalorder %s27, 0
      %p101 = por %p99, %p100
      %s103 = sadd.s32 %s102, 1
      %p106 = scmp.eq.s32.totalorder %s21, 1
      %p107 = scmp.ne.s32.totalorder %s102, %s104
      %p108 = scmp.eq.s32.totalorder %s21, 0
      %p109 = por %p107, %p108
      %p110 = scmp.ne.s32.totalorder %s102, %s104
      %p111 = scmp.eq.s32.totalorder %s26, 1
      %p112 = por %p110, %p111
      %p113 = scmp.ne.s32.totalorder %s104, %s105
      %p114 = scmp.eq.s32.totalorder %s26, 0
      %p115 = por %p113, %p114
      %p116 = scmp.ne.s32.totalorder %s104, %s105
      %p117 = scmp.eq.s32.totalorder %s27, 1
      %p118 = por %p116, %p117
      %p120 = scmp.ne.s32.totalorder %s105, %s119
      %p121 = scmp.eq.s32.totalorder %s27, 0
      %p122 = por %p120, %p121
      %s124 = sadd.s32 %s123, 1
      %p127 = scmp.eq.s32.totalorder %s21, 1
      %p128 = scmp.ne.s32.totalorder %s123, %s125
      %p129 = scmp.eq.s32.totalorder %s21, 0
      %p130 = por %p128, %p129
      %p131 = scmp.ne.s32.totalorder %s123, %s125
      %p132 = scmp.eq.s32.totalorder %s26, 1
      %p133 = por %p131, %p132
      %p134 = scmp.ne.s32.totalorder %s125, %s126
      %p135 = scmp.eq.s32.totalorder %s26, 0
      %p136 = por %p134, %p135
      %p137 = scmp.ne.s32.totalorder %s125, %s126
      %p138 = scmp.eq.s32.totalorder %s27, 1
      %p139 = por %p137, %p138
      %p141 = scmp.ne.s32.totalorder %s126, %s140
      %p142 = scmp.eq.s32.totalorder %s27, 0
      %p143 = por %p141, %p142
      %s145 = sadd.s32 %s144, 1
      %p148 = scmp.eq.s32.totalorder %s21, 1
      %p149 = scmp.ne.s32.totalorder %s144, %s146
      %p150 = scmp.eq.s32.totalorder %s21, 0
      %p151 = por %p149, %p150
      %p152 = scmp.ne.s32.totalorder %s144, %s146
      %p153 = scmp.eq.s32.totalorder %s26, 1
      %p154 = por %p152, %p153
      %p155 = scmp.ne.s32.totalorder %s146, %s147
      %p156 = scmp.eq.s32.totalorder %s26, 0
      %p157 = por %p155, %p156
      %p158 = scmp.ne.s32.totalorder %s146, %s147
      %p159 = scmp.eq.s32.totalorder %s27, 1
      %p160 = por %p158, %p159
      %p162 = scmp.ne.s32.totalorder %s147, %s161
      %p163 = scmp.eq.s32.totalorder %s27, 0
      %p164 = por %p162, %p163
      %s166 = sadd.s32 %s165, 1
      %p169 = scmp.eq.s32.totalorder %s21, 1
      %p170 = scmp.ne.s32.totalorder %s165, %s167
      %p171 = scmp.eq.s32.totalorder %s21, 0
      %p172 = por %p170, %p171
      %p173 = scmp.ne.s32.totalorder %s165, %s167
      %p174 = scmp.eq.s32.totalorder %s26, 1
      %p175 = por %p173, %p174
      %p176 = scmp.ne.s32.totalorder %s167, %s168
      %p177 = scmp.eq.s32.totalorder %s26, 0
      %p178 = por %p176, %p177
      %p179 = scmp.ne.s32.totalorder %s167, %s168
      %p180 = scmp.eq.s32.totalorder %s27, 1
      %p181 = por %p179, %p180
      %p183 = scmp.ne.s32.totalorder %s168, %s182
      %p184 = scmp.eq.s32.totalorder %s27, 0
      %p185 = por %p183, %p184
      %s186 = ssub.s32 %s21, %s28
      %p187 = scmp.eq.s32.totalorder %s186, 0
      %s189 = sadd.s32 %s188, 1
      %s190 = scalar_select %p187, %s188, %s189
      %p193 = pneg %p187
      %p194 = scmp.eq.s32.totalorder %s21, 1
      %p195 = por %p193, %p194
      %p196 = scmp.ne.s32.totalorder %s188, %s191
      %p197 = scmp.eq.s32.totalorder %s21, 0
      %p198 = por %p196, %p197
      %p199 = scmp.ne.s32.totalorder %s188, %s191
      %p200 = scmp.eq.s32.totalorder %s26, 1
      %p201 = por %p199, %p200
      %p202 = scmp.ne.s32.totalorder %s191, %s192
      %p203 = scmp.eq.s32.totalorder %s26, 0
      %p204 = por %p202, %p203
      %p205 = scmp.ne.s32.totalorder %s191, %s192
      %p206 = scmp.eq.s32.totalorder %s27, 1
      %p207 = por %p205, %p206
      %p209 = scmp.ne.s32.totalorder %s192, %s208
      %p210 = scmp.eq.s32.totalorder %s27, 0
      %p211 = por %p209, %p210
      %p212 = scmp.le.s32.totalorder 1, %s21
      %p213 = scmp.lt.s32.totalorder %s21, 3
      %p214 = pnand %p212, %p213
      %p215 = pneg %p214
      // Predicated region
      $region9: #{tpu_custom_call.1} parent=5 // pred_check
        _
      $region10: #{tpu_custom_call.1} parent=5 // pred_check_branch
        %217 = sbr.rel (%p214) target = $region12
      $region11: #{tpu_custom_call.1} parent=5 // pred_region
        %s218 = ssub.s32 %s21, 1
        // Predicated region
        $region13: #{tpu_custom_call.1} parent=11 // pred_check
          %p219 = pneg %p68
        $region14: #{tpu_custom_call.1} parent=11 // pred_check_branch
          %221 = sbr.rel (%p219) target = $region16
        $region15: #{tpu_custom_call.1} parent=11 // pred_region
          %223 = vsyncadd [#allocation6], 0
          %s224 = sshll.u32 %s1, 4
          %s225 = int_to_ptr.hbm [resolvable:$true] %s224
          %s226 = sshll.u32 [#allocation5], 4
          %s227 = int_to_ptr.vmem [resolvable:$true] %s226
          %232 = dma.hbm_to_vmem [thread:$0]  %s225, 1024, %s227, [#allocation6], 64, 64, 4
        $region16: #{tpu_custom_call.1} parent=11 // pred_fallthru
          _
        // Predicated region
        $region17: #{tpu_custom_call.1} parent=11 // pred_check
          %p233 = pneg %p115
        $region18: #{tpu_custom_call.1} parent=11 // pred_check_branch
          %235 = sbr.rel (%p233) target = $region20
        $region19: #{tpu_custom_call.1} parent=11 // pred_region
          %237 = vsyncadd [#allocation6], 0
          %s238 = sshll.u32 %s3, 4
          %s239 = int_to_ptr.hbm [resolvable:$true] %s238
          %s240 = sshll.u32 [#allocation8], 4
          %s241 = int_to_ptr.vmem [resolvable:$true] %s240
          %246 = dma.hbm_to_vmem [thread:$0]  %s239, 3072, %s241, [#allocation6], 192, 192, 12
        $region20: #{tpu_custom_call.1} parent=11 // pred_fallthru
          _
        // Predicated region
        $region21: #{tpu_custom_call.1} parent=11 // pred_check
          %p247 = pneg %p136
        $region22: #{tpu_custom_call.1} parent=11 // pred_check_branch
          %249 = sbr.rel (%p247) target = $region24
        $region23: #{tpu_custom_call.1} parent=11 // pred_region
          %251 = vsyncadd [#allocation10], 0
          %s252 = sshll.u32 %s4, 4
          %s253 = int_to_ptr.hbm [resolvable:$true] %s252
          %s254 = sshll.u32 [#allocation9], 4
          %s255 = int_to_ptr.vmem [resolvable:$true] %s254
          %260 = dma.hbm_to_vmem [thread:$0]  %s253, 2048, %s255, [#allocation10], 128, 128, 8
        $region24: #{tpu_custom_call.1} parent=11 // pred_fallthru
          _
        // Predicated region
        $region25: #{tpu_custom_call.1} parent=11 // pred_check
          %p261 = pneg %p157
        $region26: #{tpu_custom_call.1} parent=11 // pred_check_branch
          %263 = sbr.rel (%p261) target = $region28
        $region27: #{tpu_custom_call.1} parent=11 // pred_region
          %265 = vsyncadd [#allocation10], 0
          %s266 = sshll.u32 %s5, 4
          %s267 = int_to_ptr.hbm [resolvable:$true] %s266
          %s268 = sshll.u32 [#allocation11], 4
          %s269 = int_to_ptr.vmem [resolvable:$true] %s268
          %274 = dma.hbm_to_vmem [thread:$0]  %s267, 1024, %s269, [#allocation10], 64, 64, 4
        $region28: #{tpu_custom_call.1} parent=11 // pred_fallthru
          _
        // Predicated region
        $region29: #{tpu_custom_call.1} parent=11 // pred_check
          %p275 = pneg %p178
        $region30: #{tpu_custom_call.1} parent=11 // pred_check_branch
          %277 = sbr.rel (%p275) target = $region32
        $region31: #{tpu_custom_call.1} parent=11 // pred_region
          _
        $region32: #{tpu_custom_call.1} parent=11 // pred_fallthru
          _
      $region12: #{tpu_custom_call.1} parent=5 // pred_fallthru
        _
      %p278 = scmp.lt.s32.totalorder %s21, 2
      // Predicated region
      $region33: #{tpu_custom_call.1} parent=5 // pred_check
        %p279 = pneg %p278
      $region34: #{tpu_custom_call.1} parent=5 // pred_check_branch
        %281 = sbr.rel (%p279) target = $region36
      $region35: #{tpu_custom_call.1} parent=5 // pred_region
        // Predicated region
        $region37: #{tpu_custom_call.1} parent=35 // pred_check
          %p282 = pneg %p41
        $region38: #{tpu_custom_call.1} parent=35 // pred_check_branch
          %284 = sbr.rel (%p282) target = $region40
        $region39: #{tpu_custom_call.1} parent=35 // pred_region
          %s285 = sand.u32 %s21, 1
          %s286 = scalar_lea.sflag [#allocation3], %s285
          %s287 = sand.u32 %s31, 1
          %s288 = smul.addr %s287, 4
          %s289 = scalar_lea.vmem [#allocation2], %s288
          %291 = vsyncadd %s286, 0
          %s292 = smul.addr %s21, 4
          %s293 = scalar_lea.hbm %s0, %s292
          %s295 = sshll.u32 %s293, 4
          %s296 = int_to_ptr.hbm [resolvable:$true] %s295
          %s297 = sshll.u32 %s289, 4
          %s298 = int_to_ptr.vmem [resolvable:$true] %s297
          %300 = dma.hbm_to_vmem [thread:$0]  %s296, 64, %s298, %s286
        $region40: #{tpu_custom_call.1} parent=35 // pred_fallthru
          _
        // Predicated region
        $region41: #{tpu_custom_call.1} parent=35 // pred_check
          %p301 = pneg %p88
        $region42: #{tpu_custom_call.1} parent=35 // pred_check_branch
          %303 = sbr.rel (%p301) target = $region44
        $region43: #{tpu_custom_call.1} parent=35 // pred_region
          %s304 = sand.u32 %s21, 1
          %s305 = scalar_lea.sflag [#allocation3], %s304
          %s306 = sand.u32 %s78, 1
          %s307 = smul.addr %s306, 8
          %s308 = scalar_lea.vmem [#allocation7], %s307
          %310 = vsyncadd %s305, 0
          %s311 = smul.addr %s21, 8
          %s312 = scalar_lea.hbm %s2, %s311
          %s314 = sshll.u32 %s312, 4
          %s315 = int_to_ptr.hbm [resolvable:$true] %s314
          %s316 = sshll.u32 %s308, 4
          %s317 = int_to_ptr.vmem [resolvable:$true] %s316
          %319 = dma.hbm_to_vmem [thread:$0]  %s315, 128, %s317, %s305
        $region44: #{tpu_custom_call.1} parent=35 // pred_fallthru
          _
      $region36: #{tpu_custom_call.1} parent=5 // pred_fallthru
        _
      %p320 = scmp.le.s32.totalorder 1, %s21
      %p321 = scmp.lt.s32.totalorder %s21, 3
      %p322 = pnand %p320, %p321
      %p323 = pneg %p322
      // Predicated region
      $region45: #{tpu_custom_call.1} parent=5 // pred_check
        _
      $region46: #{tpu_custom_call.1} parent=5 // pred_check_branch
        %325 = sbr.rel (%p322) target = $region48
      $region47: #{tpu_custom_call.1} parent=5 // pred_region
        %s326 = ssub.s32 %s21, 1
        %s327 = sand.u32 %s26, 1
        %s328 = scalar_lea.sflag [#allocation3], %s327
        %s329 = sand.u32 %s34, 1
        %s330 = smul.addr %s329, 4
        %s331 = scalar_lea.vmem [#allocation2], %s330
        // Predicated region
        $region49: #{tpu_custom_call.1} parent=47 // pred_check
          %p332 = pneg %p47
        $region50: #{tpu_custom_call.1} parent=47 // pred_check_branch
          %334 = sbr.rel (%p332) target = $region52
        $region51: #{tpu_custom_call.1} parent=47 // pred_region
          %336 = dma.done %s328, 64
        $region52: #{tpu_custom_call.1} parent=47 // pred_fallthru
          _
        // Predicated region
        $region53: #{tpu_custom_call.1} parent=47 // pred_check
          %p337 = pneg %p68
        $region54: #{tpu_custom_call.1} parent=47 // pred_check_branch
          %339 = sbr.rel (%p337) target = $region56
        $region55: #{tpu_custom_call.1} parent=47 // pred_region
          %341 = dma.done [#allocation6], 1024
        $region56: #{tpu_custom_call.1} parent=47 // pred_fallthru
          _
        %s342 = sand.u32 %s26, 1
        %s343 = scalar_lea.sflag [#allocation3], %s342
        %s344 = sand.u32 %s81, 1
        %s345 = smul.addr %s344, 8
        %s346 = scalar_lea.vmem [#allocation7], %s345
        // Predicated region
        $region57: #{tpu_custom_call.1} parent=47 // pred_check
          %p347 = pneg %p94
        $region58: #{tpu_custom_call.1} parent=47 // pred_check_branch
          %349 = sbr.rel (%p347) target = $region60
        $region59: #{tpu_custom_call.1} parent=47 // pred_region
          %351 = dma.done %s343, 128
        $region60: #{tpu_custom_call.1} parent=47 // pred_fallthru
          _
        // Predicated region
        $region61: #{tpu_custom_call.1} parent=47 // pred_check
          %p352 = pneg %p115
        $region62: #{tpu_custom_call.1} parent=47 // pred_check_branch
          %354 = sbr.rel (%p352) target = $region64
        $region63: #{tpu_custom_call.1} parent=47 // pred_region
          %356 = dma.done [#allocation6], 3072
        $region64: #{tpu_custom_call.1} parent=47 // pred_fallthru
          _
        // Predicated region
        $region65: #{tpu_custom_call.1} parent=47 // pred_check
          %p357 = pneg %p136
        $region66: #{tpu_custom_call.1} parent=47 // pred_check_branch
          %359 = sbr.rel (%p357) target = $region68
        $region67: #{tpu_custom_call.1} parent=47 // pred_region
          %361 = dma.done [#allocation10], 2048
        $region68: #{tpu_custom_call.1} parent=47 // pred_fallthru
          _
        // Predicated region
        $region69: #{tpu_custom_call.1} parent=47 // pred_check
          %p362 = pneg %p157
        $region70: #{tpu_custom_call.1} parent=47 // pred_check_branch
          %364 = sbr.rel (%p362) target = $region72
        $region71: #{tpu_custom_call.1} parent=47 // pred_region
          %366 = dma.done [#allocation10], 1024
        $region72: #{tpu_custom_call.1} parent=47 // pred_fallthru
          _
        %s367 = sand.u32 %s26, 1
        %s368 = scalar_lea.sflag [#allocation3], %s367
        %s369 = sand.u32 %s34, 1
        %s370 = smul.addr %s369, 4
        %s371 = scalar_lea.vmem [#allocation2], %s370
        %p372 = pneg %p47
        %p373 = pneg %p44
        %p374 = pneg %p68
        %p375 = pneg %p65
        %s376 = sand.u32 %s26, 1
        %s377 = scalar_lea.sflag [#allocation3], %s376
        %s378 = sand.u32 %s81, 1
        %s379 = smul.addr %s378, 8
        %s380 = scalar_lea.vmem [#allocation7], %s379
        %p381 = pneg %p94
        %p382 = pneg %p91
        %p383 = pneg %p115
        %p384 = pneg %p112
        %p385 = pneg %p136
        %p386 = pneg %p133
        %p387 = pneg %p157
        %p388 = pneg %p154
        %p389 = pneg %p178
        %p390 = pneg %p175
        %p391 = pneg %p204
        %p392 = pneg %p201
        %s393 = sand.u32 %s191, 1
        %s394 = scalar_lea.sflag [#allocation4], %s393
        %s395 = sand.u32 %s191, 1
        %s396 = smul.addr %s395, 8
        %s397 = scalar_lea.vmem [#allocation12], %s396
        %v398 = vld [vmem:[%s331] sm:$0xf]
        %v399 = vld [vmem:[#allocation5] sm:$0xf]
        %v400 = vld [vmem:[#allocation5 + $0x4] sm:$0xf]
        %v401 = vld [vmem:[#allocation5 + $0x8] sm:$0xf]
        %v402 = vld [vmem:[#allocation5 + $0xc] sm:$0xf]
        %v403 = vld [vmem:[#allocation5 + $0x10] sm:$0xf]
        %v404 = vld [vmem:[#allocation5 + $0x14] sm:$0xf]
        %v405 = vld [vmem:[#allocation5 + $0x18] sm:$0xf]
        %v406 = vld [vmem:[#allocation5 + $0x1c] sm:$0xf]
        %v407 = vld [vmem:[#allocation5 + $0x20] sm:$0xf]
        %v408 = vld [vmem:[#allocation5 + $0x24] sm:$0xf]
        %v409 = vld [vmem:[#allocation5 + $0x28] sm:$0xf]
        %v410 = vld [vmem:[#allocation5 + $0x2c] sm:$0xf]
        %v411 = vld [vmem:[#allocation5 + $0x30] sm:$0xf]
        %v412 = vld [vmem:[#allocation5 + $0x34] sm:$0xf]
        %v413 = vld [vmem:[#allocation5 + $0x38] sm:$0xf]
        %v414 = vld [vmem:[#allocation5 + $0x3c] sm:$0xf]
        %v431 = vunpack.c.l.b16 %v399
        %v432 = vunpack.c.l.b16 %v400
        %v433 = vunpack.c.l.b16 %v401
        %v434 = vunpack.c.l.b16 %v402
        %v435 = vunpack.c.l.b16 %v403
        %v436 = vunpack.c.l.b16 %v404
        %v437 = vunpack.c.l.b16 %v405
        %v438 = vunpack.c.l.b16 %v406
        %v439 = vunpack.c.l.b16 %v407
        %v440 = vunpack.c.l.b16 %v408
        %v441 = vunpack.c.l.b16 %v409
        %v442 = vunpack.c.l.b16 %v410
        %v443 = vunpack.c.l.b16 %v411
        %v444 = vunpack.c.l.b16 %v412
        %v445 = vunpack.c.l.b16 %v413
        %v446 = vunpack.c.l.b16 %v414
        %v447 = vpack.c.b16 %v432, %v431
        %v448 = vpack.c.b16 %v434, %v433
        %v449 = vpack.c.b16 %v436, %v435
        %v450 = vpack.c.b16 %v438, %v437
        %v451 = vpack.c.b16 %v440, %v439
        %v452 = vpack.c.b16 %v442, %v441
        %v453 = vpack.c.b16 %v444, %v443
        %v454 = vpack.c.b16 %v446, %v445
        %463 = vmatpush.bf16.msra.mxu0 %v454
        %464 = vmatpush.bf16.msra.mxu0 %v453
        %465 = vmatpush.bf16.msra.mxu0 %v452
        %466 = vmatpush.bf16.msra.mxu0 %v451
        %467 = vmatpush.bf16.msra.mxu0 %v450
        %468 = vmatpush.bf16.msra.mxu0 %v449
        %469 = vmatpush.bf16.msra.mxu0 %v448
        %470 = vmatpush.bf16.msra.mxu0 %v447
        %471 = vmatmul.bf16.gmra.mxu0 %v398
        %v472 = vpop.f32.mrf.mxu0
        %v473 = vadd.f32 0.0, %v472
        %v474 = vpop.f32.mrf.mxu0
        %475 = vdwg.mxu0
        %v476 = vpack.c.bf16 %v473, %v473
        %v477 = vld [vmem:[#allocation8] sm:$0xff]
        %v478 = vld [vmem:[#allocation8 + $0x8] sm:$0xf]
        %v479 = vld [vmem:[#allocation8 + $0xc] sm:$0xff]
        %v480 = vld [vmem:[#allocation8 + $0x14] sm:$0xf]
        %v481 = vld [vmem:[#allocation8 + $0x18] sm:$0xff]
        %v482 = vld [vmem:[#allocation8 + $0x20] sm:$0xf]
        %v483 = vld [vmem:[#allocation8 + $0x24] sm:$0xff]
        %v484 = vld [vmem:[#allocation8 + $0x2c] sm:$0xf]
        %v485 = vld [vmem:[#allocation8 + $0x30] sm:$0xff]
        %v486 = vld [vmem:[#allocation8 + $0x38] sm:$0xf]
        %v487 = vld [vmem:[#allocation8 + $0x3c] sm:$0xff]
        %v488 = vld [vmem:[#allocation8 + $0x44] sm:$0xf]
        %v489 = vld [vmem:[#allocation8 + $0x48] sm:$0xff]
        %v490 = vld [vmem:[#allocation8 + $0x50] sm:$0xf]
        %v491 = vld [vmem:[#allocation8 + $0x54] sm:$0xff]
        %v492 = vld [vmem:[#allocation8 + $0x5c] sm:$0xf]
        %v493 = vld [vmem:[#allocation8 + $0x60] sm:$0xff]
        %v494 = vld [vmem:[#allocation8 + $0x68] sm:$0xf]
        %v495 = vld [vmem:[#allocation8 + $0x6c] sm:$0xff]
        %v496 = vld [vmem:[#allocation8 + $0x74] sm:$0xf]
        %v497 = vld [vmem:[#allocation8 + $0x78] sm:$0xff]
        %v498 = vld [vmem:[#allocation8 + $0x80] sm:$0xf]
        %v499 = vld [vmem:[#allocation8 + $0x84] sm:$0xff]
        %v500 = vld [vmem:[#allocation8 + $0x8c] sm:$0xf]
        %v501 = vld [vmem:[#allocation8 + $0x90] sm:$0xff]
        %v502 = vld [vmem:[#allocation8 + $0x98] sm:$0xf]
        %v503 = vld [vmem:[#allocation8 + $0x9c] sm:$0xff]
        %v504 = vld [vmem:[#allocation8 + $0xa4] sm:$0xf]
        %v505 = vld [vmem:[#allocation8 + $0xa8] sm:$0xff]
        %v506 = vld [vmem:[#allocation8 + $0xb0] sm:$0xf]
        %v507 = vld [vmem:[#allocation8 + $0xb4] sm:$0xff]
        %v508 = vld [vmem:[#allocation8 + $0xbc] sm:$0xf]
        %v509 = vld [vmem:[%s6] sm:$0x7]
        %v511 = vperm.slane %v509, 0
        %v512 = vperm.slane %v509, 1
        %v513 = vperm.slane %v509, 2
        %v549 = vunpack.c.l.b16 %v477
        %v550 = vunpack.c.h.b16 %v477
        %v551 = vunpack.c.l.b16 %v478
        %v552 = vunpack.c.l.b16 %v479
        %v553 = vunpack.c.h.b16 %v479
        %v554 = vunpack.c.l.b16 %v480
        %v555 = vunpack.c.l.b16 %v481
        %v556 = vunpack.c.h.b16 %v481
        %v557 = vunpack.c.l.b16 %v482
        %v558 = vunpack.c.l.b16 %v483
        %v559 = vunpack.c.h.b16 %v483
        %v560 = vunpack.c.l.b16 %v484
        %v561 = vunpack.c.l.b16 %v485
        %v562 = vunpack.c.h.b16 %v485
        %v563 = vunpack.c.l.b16 %v486
        %v564 = vunpack.c.l.b16 %v487
        %v565 = vunpack.c.h.b16 %v487
        %v566 = vunpack.c.l.b16 %v488
        %v567 = vunpack.c.l.b16 %v489
        %v568 = vunpack.c.h.b16 %v489
        %v569 = vunpack.c.l.b16 %v490
        %v570 = vunpack.c.l.b16 %v491
        %v571 = vunpack.c.h.b16 %v491
        %v572 = vunpack.c.l.b16 %v492
        %v573 = vunpack.c.l.b16 %v493
        %v574 = vunpack.c.h.b16 %v493
        %v575 = vunpack.c.l.b16 %v494
        %v576 = vunpack.c.l.b16 %v495
        %v577 = vunpack.c.h.b16 %v495
        %v578 = vunpack.c.l.b16 %v496
        %v579 = vunpack.c.l.b16 %v497
        %v580 = vunpack.c.h.b16 %v497
        %v581 = vunpack.c.l.b16 %v498
        %v582 = vunpack.c.l.b16 %v499
        %v583 = vunpack.c.h.b16 %v499
        %v584 = vunpack.c.l.b16 %v500
        %v585 = vunpack.c.l.b16 %v501
        %v586 = vunpack.c.h.b16 %v501
        %v587 = vunpack.c.l.b16 %v502
        %v588 = vunpack.c.l.b16 %v503
        %v589 = vunpack.c.h.b16 %v503
        %v590 = vunpack.c.l.b16 %v504
        %v591 = vunpack.c.l.b16 %v505
        %v592 = vunpack.c.h.b16 %v505
        %v593 = vunpack.c.l.b16 %v506
        %v594 = vunpack.c.l.b16 %v507
        %v595 = vunpack.c.h.b16 %v507
        %v596 = vunpack.c.l.b16 %v508
        %v597 = vpack.c.b16 %v552, %v549
        %v598 = vpack.c.b16 %v553, %v550
        %v599 = vpack.c.b16 %v554, %v551
        %v600 = vpack.c.b16 %v558, %v555
        %v601 = vpack.c.b16 %v559, %v556
        %v602 = vpack.c.b16 %v560, %v557
        %v603 = vpack.c.b16 %v564, %v561
        %v604 = vpack.c.b16 %v565, %v562
        %v605 = vpack.c.b16 %v566, %v563
        %v606 = vpack.c.b16 %v570, %v567
        %v607 = vpack.c.b16 %v571, %v568
        %v608 = vpack.c.b16 %v572, %v569
        %v609 = vpack.c.b16 %v576, %v573
        %v610 = vpack.c.b16 %v577, %v574
        %v611 = vpack.c.b16 %v578, %v575
        %v612 = vpack.c.b16 %v582, %v579
        %v613 = vpack.c.b16 %v583, %v580
        %v614 = vpack.c.b16 %v584, %v581
        %v615 = vpack.c.b16 %v588, %v585
        %v616 = vpack.c.b16 %v589, %v586
        %v617 = vpack.c.b16 %v590, %v587
        %v618 = vpack.c.b16 %v594, %v591
        %v619 = vpack.c.b16 %v595, %v592
        %v620 = vpack.c.b16 %v596, %v593
        %645 = vmatpush.bf16.msra.mxu0 %v618
        %646 = vmatpush.bf16.msra.mxu0 %v615
        %647 = vmatpush.bf16.msra.mxu0 %v612
        %648 = vmatpush.bf16.msra.mxu0 %v609
        %649 = vmatpush.bf16.msra.mxu0 %v606
        %650 = vmatpush.bf16.msra.mxu0 %v603
        %651 = vmatpush.bf16.msra.mxu0 %v600
        %652 = vmatpush.bf16.msra.mxu0 %v597
        %653 = vmatmul.bf16.gmra.mxu0 %v476
        %v654 = vpop.f32.mrf.mxu0
        %v655 = vadd.f32 %v511, %v654
        %v656 = vpop.f32.mrf.mxu0
        %657 = vdwg.mxu0
        %658 = vmatpush.bf16.msra.mxu0 %v619
        %659 = vmatpush.bf16.msra.mxu0 %v616
        %660 = vmatpush.bf16.msra.mxu0 %v613
        %661 = vmatpush.bf16.msra.mxu0 %v610
        %662 = vmatpush.bf16.msra.mxu0 %v607
        %663 = vmatpush.bf16.msra.mxu0 %v604
        %664 = vmatpush.bf16.msra.mxu0 %v601
        %665 = vmatpush.bf16.msra.mxu0 %v598
        %666 = vmatmul.bf16.gmra.mxu0 %v476
        %v667 = vpop.f32.mrf.mxu0
        %v668 = vadd.f32 %v512, %v667
        %v669 = vpop.f32.mrf.mxu0
        %670 = vdwg.mxu0
        %671 = vmatpush.bf16.msra.mxu0 %v620
        %672 = vmatpush.bf16.msra.mxu0 %v617
        %673 = vmatpush.bf16.msra.mxu0 %v614
        %674 = vmatpush.bf16.msra.mxu0 %v611
        %675 = vmatpush.bf16.msra.mxu0 %v608
        %676 = vmatpush.bf16.msra.mxu0 %v605
        %677 = vmatpush.bf16.msra.mxu0 %v602
        %678 = vmatpush.bf16.msra.mxu0 %v599
        %679 = vmatmul.bf16.gmra.mxu0 %v476
        %v680 = vpop.f32.mrf.mxu0
        %v681 = vadd.f32 %v513, %v680
        %v682 = vpop.f32.mrf.mxu0
        %683 = vdwg.mxu0
        %v684 = vld [vmem:[%s346] sm:$0xff]
        %v685 = vpack.c.bf16 %v684, %v684
        %v686 = vld [vmem:[#allocation9] sm:$0xff]
        %v687 = vld [vmem:[#allocation9 + $0x8] sm:$0xff]
        %v688 = vld [vmem:[#allocation9 + $0x10] sm:$0xff]
        %v689 = vld [vmem:[#allocation9 + $0x18] sm:$0xff]
        %v690 = vld [vmem:[#allocation9 + $0x20] sm:$0xff]
        %v691 = vld [vmem:[#allocation9 + $0x28] sm:$0xff]
        %v692 = vld [vmem:[#allocation9 + $0x30] sm:$0xff]
        %v693 = vld [vmem:[#allocation9 + $0x38] sm:$0xff]
        %v694 = vld [vmem:[#allocation9 + $0x40] sm:$0xff]
        %v695 = vld [vmem:[#allocation9 + $0x48] sm:$0xff]
        %v696 = vld [vmem:[#allocation9 + $0x50] sm:$0xff]
        %v697 = vld [vmem:[#allocation9 + $0x58] sm:$0xff]
        %v698 = vld [vmem:[#allocation9 + $0x60] sm:$0xff]
        %v699 = vld [vmem:[#allocation9 + $0x68] sm:$0xff]
        %v700 = vld [vmem:[#allocation9 + $0x70] sm:$0xff]
        %v701 = vld [vmem:[#allocation9 + $0x78] sm:$0xff]
        %v718 = vunpack.c.l.b16 %v686
        %v719 = vunpack.c.h.b16 %v686
        %v720 = vunpack.c.l.b16 %v687
        %v721 = vunpack.c.h.b16 %v687
        %v722 = vunpack.c.l.b16 %v688
        %v723 = vunpack.c.h.b16 %v688
        %v724 = vunpack.c.l.b16 %v689
        %v725 = vunpack.c.h.b16 %v689
        %v726 = vunpack.c.l.b16 %v690
        %v727 = vunpack.c.h.b16 %v690
        %v728 = vunpack.c.l.b16 %v691
        %v729 = vunpack.c.h.b16 %v691
        %v730 = vunpack.c.l.b16 %v692
        %v731 = vunpack.c.h.b16 %v692
        %v732 = vunpack.c.l.b16 %v693
        %v733 = vunpack.c.h.b16 %v693
        %v734 = vunpack.c.l.b16 %v694
        %v735 = vunpack.c.h.b16 %v694
        %v736 = vunpack.c.l.b16 %v695
        %v737 = vunpack.c.h.b16 %v695
        %v738 = vunpack.c.l.b16 %v696
        %v739 = vunpack.c.h.b16 %v696
        %v740 = vunpack.c.l.b16 %v697
        %v741 = vunpack.c.h.b16 %v697
        %v742 = vunpack.c.l.b16 %v698
        %v743 = vunpack.c.h.b16 %v698
        %v744 = vunpack.c.l.b16 %v699
        %v745 = vunpack.c.h.b16 %v699
        %v746 = vunpack.c.l.b16 %v700
        %v747 = vunpack.c.h.b16 %v700
        %v748 = vunpack.c.l.b16 %v701
        %v749 = vunpack.c.h.b16 %v701
        %v750 = vpack.c.b16 %v720, %v718
        %v751 = vpack.c.b16 %v721, %v719
        %v752 = vpack.c.b16 %v724, %v722
        %v753 = vpack.c.b16 %v725, %v723
        %v754 = vpack.c.b16 %v728, %v726
        %v755 = vpack.c.b16 %v729, %v727
        %v756 = vpack.c.b16 %v732, %v730
        %v757 = vpack.c.b16 %v733, %v731
        %v758 = vpack.c.b16 %v736, %v734
        %v759 = vpack.c.b16 %v737, %v735
        %v760 = vpack.c.b16 %v740, %v738
        %v761 = vpack.c.b16 %v741, %v739
        %v762 = vpack.c.b16 %v744, %v742
        %v763 = vpack.c.b16 %v745, %v743
        %v764 = vpack.c.b16 %v748, %v746
        %v765 = vpack.c.b16 %v749, %v747
        %782 = vmatpush.bf16.msra.mxu0 %v764
        %783 = vmatpush.bf16.msra.mxu0 %v762
        %784 = vmatpush.bf16.msra.mxu0 %v760
        %785 = vmatpush.bf16.msra.mxu0 %v758
        %786 = vmatpush.bf16.msra.mxu0 %v756
        %787 = vmatpush.bf16.msra.mxu0 %v754
        %788 = vmatpush.bf16.msra.mxu0 %v752
        %789 = vmatpush.bf16.msra.mxu0 %v750
        %790 = vmatmul.bf16.gmra.mxu0 %v685
        %v791 = vpop.f32.mrf.mxu0
        %v792 = vadd.f32 0.0, %v791
        %v793 = vpop.f32.mrf.mxu0
        %794 = vdwg.mxu0
        %795 = vmatpush.bf16.msra.mxu0 %v765
        %796 = vmatpush.bf16.msra.mxu0 %v763
        %797 = vmatpush.bf16.msra.mxu0 %v761
        %798 = vmatpush.bf16.msra.mxu0 %v759
        %799 = vmatpush.bf16.msra.mxu0 %v757
        %800 = vmatpush.bf16.msra.mxu0 %v755
        %801 = vmatpush.bf16.msra.mxu0 %v753
        %802 = vmatpush.bf16.msra.mxu0 %v751
        %803 = vmatmul.bf16.gmra.mxu0 %v685
        %v804 = vpop.f32.mrf.mxu0
        %v805 = vadd.f32 0.0, %v804
        %v806 = vpop.f32.mrf.mxu0
        %807 = vdwg.mxu0
        %v808 = vadd.f32 %v655, %v792
        %v809 = vxor.u32 %v808, 2147483648
        %v810 = vmul.f32 %v809, 1.442695
        %v811 = vpow.pop %v810
        %v812 = vadd.f32 %v811, 1.0
        %v813 = vrcp.pop %v812
        %v814 = vmul.f32 %v812, %v813
        %v815 = vsub.f32 1.0, %v814
        %v816 = vmul.f32 %v813, %v815
        %v817 = vadd.f32 %v813, %v816
        %vm818 = vweird.f32 %v812
        %vm819 = vweird.f32 %v813
        %vm820 = vmor %vm818, %vm819
        %v821 = vsel %vm820, %v813, %v817
        %v822 = vand.u32 2147483647, %v812
        %vm823 = vcmp.eq.f32.partialorder %v822, 8.507059e+37
        %v824 = vand.u32 %v812, 2147483648
        %v825 = vor.u32 1.1754944e-38, %v824
        %v826 = vsel %vm823, %v825, %v821
        %v827 = vmul.f32 1.0, %v826
        %v828 = vadd.f32 %v668, %v805
        %v829 = vxor.u32 %v828, 2147483648
        %v830 = vmul.f32 %v829, 1.442695
        %v831 = vpow.pop %v830
        %v832 = vadd.f32 %v831, 1.0
        %v833 = vrcp.pop %v832
        %v834 = vmul.f32 %v832, %v833
        %v835 = vsub.f32 1.0, %v834
        %v836 = vmul.f32 %v833, %v835
        %v837 = vadd.f32 %v833, %v836
        %vm838 = vweird.f32 %v832
        %vm839 = vweird.f32 %v833
        %vm840 = vmor %vm838, %vm839
        %v841 = vsel %vm840, %v833, %v837
        %v842 = vand.u32 2147483647, %v832
        %vm843 = vcmp.eq.f32.partialorder %v842, 8.507059e+37
        %v844 = vand.u32 %v832, 2147483648
        %v845 = vor.u32 1.1754944e-38, %v844
        %v846 = vsel %vm843, %v845, %v841
        %v847 = vmul.f32 1.0, %v846
        %v848 = vmul.f32 %v684, %v847
        %v849 = vpack.c.bf16 %v848, %v848
        %v850 = vld [vmem:[#allocation11] sm:$0xf]
        %v851 = vld [vmem:[#allocation11 + $0x4] sm:$0xf]
        %v852 = vld [vmem:[#allocation11 + $0x8] sm:$0xf]
        %v853 = vld [vmem:[#allocation11 + $0xc] sm:$0xf]
        %v854 = vld [vmem:[#allocation11 + $0x10] sm:$0xf]
        %v855 = vld [vmem:[#allocation11 + $0x14] sm:$0xf]
        %v856 = vld [vmem:[#allocation11 + $0x18] sm:$0xf]
        %v857 = vld [vmem:[#allocation11 + $0x1c] sm:$0xf]
        %v858 = vld [vmem:[#allocation11 + $0x20] sm:$0xf]
        %v859 = vld [vmem:[#allocation11 + $0x24] sm:$0xf]
        %v860 = vld [vmem:[#allocation11 + $0x28] sm:$0xf]
        %v861 = vld [vmem:[#allocation11 + $0x2c] sm:$0xf]
        %v862 = vld [vmem:[#allocation11 + $0x30] sm:$0xf]
        %v863 = vld [vmem:[#allocation11 + $0x34] sm:$0xf]
        %v864 = vld [vmem:[#allocation11 + $0x38] sm:$0xf]
        %v865 = vld [vmem:[#allocation11 + $0x3c] sm:$0xf]
        %v882 = vunpack.c.l.b16 %v850
        %v883 = vunpack.c.l.b16 %v851
        %v884 = vunpack.c.l.b16 %v852
        %v885 = vunpack.c.l.b16 %v853
        %v886 = vunpack.c.l.b16 %v854
        %v887 = vunpack.c.l.b16 %v855
        %v888 = vunpack.c.l.b16 %v856
        %v889 = vunpack.c.l.b16 %v857
        %v890 = vunpack.c.l.b16 %v858
        %v891 = vunpack.c.l.b16 %v859
        %v892 = vunpack.c.l.b16 %v860
        %v893 = vunpack.c.l.b16 %v861
        %v894 = vunpack.c.l.b16 %v862
        %v895 = vunpack.c.l.b16 %v863
        %v896 = vunpack.c.l.b16 %v864
        %v897 = vunpack.c.l.b16 %v865
        %v898 = vpack.c.b16 %v883, %v882
        %v899 = vpack.c.b16 %v885, %v884
        %v900 = vpack.c.b16 %v887, %v886
        %v901 = vpack.c.b16 %v889, %v888
        %v902 = vpack.c.b16 %v891, %v890
        %v903 = vpack.c.b16 %v893, %v892
        %v904 = vpack.c.b16 %v895, %v894
        %v905 = vpack.c.b16 %v897, %v896
        %914 = vmatpush.bf16.msra.mxu0 %v905
        %915 = vmatpush.bf16.msra.mxu0 %v904
        %916 = vmatpush.bf16.msra.mxu0 %v903
        %917 = vmatpush.bf16.msra.mxu0 %v902
        %918 = vmatpush.bf16.msra.mxu0 %v901
        %919 = vmatpush.bf16.msra.mxu0 %v900
        %920 = vmatpush.bf16.msra.mxu0 %v899
        %921 = vmatpush.bf16.msra.mxu0 %v898
        %922 = vmatmul.bf16.gmra.mxu0 %v849
        %v923 = vpop.f32.mrf.mxu0
        %v924 = vadd.f32 0.0, %v923
        %v925 = vpop.f32.mrf.mxu0
        %926 = vdwg.mxu0
        %v927 = vadd.f32 %v681, %v924
        %v928 = vtanh.pop %v927
        %v929 = vmul.f32 %v827, %v684
        %v930 = vsub.f32 1.0, %v827
        %v931 = vmul.f32 %v930, %v928
        %v932 = vadd.f32 %v929, %v931
        %933 = vst [vmem:[%s397] sm:$0xff] %v932
        %s934 = sand.u32 %s191, 1
        %s935 = scalar_lea.sflag [#allocation4], %s934
        %s936 = sand.u32 %s191, 1
        %s937 = smul.addr %s936, 8
        %s938 = scalar_lea.vmem [#allocation12], %s937
        // Predicated region
        $region73: #{tpu_custom_call.1} parent=47 // pred_check
          %p939 = pneg %p201
        $region74: #{tpu_custom_call.1} parent=47 // pred_check_branch
          %941 = sbr.rel (%p939) target = $region76
        $region75: #{tpu_custom_call.1} parent=47 // pred_region
          %943 = vsyncadd %s935, 0
          %s944 = smul.addr %s26, 8
          %s945 = scalar_lea.hbm %s7, %s944
          %s947 = sshll.u32 %s938, 4
          %s948 = int_to_ptr.vmem [resolvable:$true] %s947
          %s949 = sshll.u32 %s945, 4
          %s950 = int_to_ptr.hbm [resolvable:$true] %s949
          %952 = dma.vmem_to_hbm [thread:$0]  %s948, 128, %s950, %s935
        $region76: #{tpu_custom_call.1} parent=47 // pred_fallthru
          _
      $region48: #{tpu_custom_call.1} parent=5 // pred_fallthru
        _
      %p953 = scmp.le.s32.totalorder 2, %s21
      // Predicated region
      $region77: #{tpu_custom_call.1} parent=5 // pred_check
        %p954 = pneg %p953
      $region78: #{tpu_custom_call.1} parent=5 // pred_check_branch
        %956 = sbr.rel (%p954) target = $region80
      $region79: #{tpu_custom_call.1} parent=5 // pred_region
        %s957 = ssub.s32 %s21, 2
        // Predicated region
        $region81: #{tpu_custom_call.1} parent=79 // pred_check
          %p958 = pneg %p207
        $region82: #{tpu_custom_call.1} parent=79 // pred_check_branch
          %960 = sbr.rel (%p958) target = $region84
        $region83: #{tpu_custom_call.1} parent=79 // pred_region
          %s961 = sand.u32 %s192, 1
          %s962 = scalar_lea.sflag [#allocation4], %s961
          %s963 = sand.u32 %s192, 1
          %s964 = smul.addr %s963, 8
          %s965 = scalar_lea.vmem [#allocation12], %s964
          %967 = dma.done %s962, 128
        $region84: #{tpu_custom_call.1} parent=79 // pred_fallthru
          _
      $region80: #{tpu_custom_call.1} parent=5 // pred_fallthru
        _
    $region6: #{tpu_custom_call.1} parent=1 // loop_footer
      %s25 = sadd.s32 1, %s21
    $region7: #{tpu_custom_call.1} parent=1 // loop_footer_branch
      %20 = sbr.rel target = $region3
    $region8: #{tpu_custom_call.1} parent=1 // loop_exit
      _
    %968 = vsyncpa [#allocation3], 1
    %s969 = scalar_lea.sflag [#allocation3], 1
    %970 = vsyncpa %s969, 1
    %971 = vsyncpa [#allocation6], 1
    %972 = vsyncpa [#allocation10], 1
    %973 = vsyncpa [#allocation4], 1
    %s974 = scalar_lea.sflag [#allocation4], 1
    %975 = vsyncpa %s974, 1

// kernel: tpu_custom_call.1
$region0: #{tpu_custom_call.1}
  #allocation0 [shape = 'u32[]', space=smem, size = 0x4, offset = 0x4, fixed_abs, tag = 'smem constant byte address 0x4 - core index']
  #allocation1 [shape = 'u32[72,128]{1,0:T(1,128)}', space=vmem, size = 0x9000, scoped, tag = 'internal scratch']
  %s0 = inlined_call_operand.hbm [shape: bf16[16,128], index: 0, kind: input, shape index: {}]
  %s1 = inlined_call_operand.hbm [shape: bf16[128,128], index: 1, kind: input, shape index: {}]
  %s2 = inlined_call_operand.hbm [shape: f32[16,128], index: 2, kind: input, shape index: {}]
  %s3 = inlined_call_operand.hbm [shape: bf16[128,384], index: 3, kind: input, shape index: {}]
  %s4 = inlined_call_operand.hbm [shape: bf16[128,256], index: 4, kind: input, shape index: {}]
  %s5 = inlined_call_operand.hbm [shape: bf16[128,128], index: 5, kind: input, shape index: {}]
  %s6 = inlined_call_operand.vmem [shape: f32[1,384], index: 6, kind: input, shape index: {}]
  %s7 = inlined_call_operand.hbm [shape: f32[16,128], index: 7, kind: output, shape index: {}]
  %s8 = sld [smem:[#allocation0]]
  $region85: #{tpu_custom_call.1} parent=0
    _
  %s10 = ssub.s32 1, %s8
  %s11 = scalar_select 0, %s10, %s8
  $region1: #{tpu_custom_call.1} parent=0
    #allocation2 [shape = 'u8[4096]{0}', space=vmem, size = 0x1000, scoped, tag = 'input window, operand 0']
    #allocation3 [shape = 's32[2]{0}', space=sflag, size = 0x8, scoped, tag = 'scoped memory for tpu_custom_call.1']
    #allocation4 [shape = 's32[2]{0}', space=sflag, size = 0x8, scoped, tag = 'scoped memory for tpu_custom_call.1']
    #allocation5 [shape = 'u8[32768]{0}', space=vmem, size = 0x8000, scoped, tag = 'input window, operand 1, single buffered']
    #allocation6 [shape = 's32[1]{0}', space=sflag, size = 0x4, scoped, tag = 'scoped memory for tpu_custom_call.1']
    #allocation7 [shape = 'u8[8192]{0}', space=vmem, size = 0x2000, scoped, tag = 'input window, operand 2']
    #allocation8 [shape = 'u8[98304]{0}', space=vmem, size = 0x18000, scoped, tag = 'input window, operand 3, single buffered']
    #allocation9 [shape = 'u8[65536]{0}', space=vmem, size = 0x10000, scoped, tag = 'input window, operand 4, single buffered']
    #allocation10 [shape = 's32[1]{0}', space=sflag, size = 0x4, scoped, tag = 'scoped memory for tpu_custom_call.1']
    #allocation11 [shape = 'u8[32768]{0}', space=vmem, size = 0x8000, scoped, tag = 'input window, operand 5, single buffered']
    #allocation12 [shape = 'u8[8192]{0}', space=vmem, size = 0x2000, scoped, tag = 'output window, operand 0']
    %12 = vsyncpa [#allocation3], 0
    %s13 = scalar_lea.sflag [#allocation3], 1
    %14 = vsyncpa %s13, 0
    %15 = vsyncpa [#allocation6], 0
    %16 = vsyncpa [#allocation10], 0
    %17 = vsyncpa [#allocation4], 0
    %s18 = scalar_lea.sflag [#allocation4], 1
    %19 = vsyncpa %s18, 0
    loop: start=0, step=1, limit=4
    $region2: #{tpu_custom_call.1} parent=1 // loop_pre_header
      _
    $region3: #{tpu_custom_call.1} parent=1 // loop_header
      %s21 = sphi 0, %s25
      %p22 = scmp.ge.s32.totalorder %s21, 4
      %s31 = sphi 0, %s33
      %s34 = sphi 0, %s31
      %s35 = sphi 0, %s34
      %s51 = sphi 0, %s35
      %s55 = sphi 0, %s55
      %s57 = sphi 0, %s55
      %s58 = sphi 0, %s57
      %s72 = sphi 0, %s58
      %s78 = sphi 0, %s80
      %s81 = sphi 0, %s78
      %s82 = sphi 0, %s81
      %s98 = sphi 0, %s82
      %s102 = sphi 0, %s102
      %s104 = sphi 0, %s102
      %s105 = sphi 0, %s104
      %s119 = sphi 0, %s105
      %s123 = sphi 0, %s123
      %s125 = sphi 0, %s123
      %s126 = sphi 0, %s125
      %s140 = sphi 0, %s126
      %s144 = sphi 0, %s144
      %s146 = sphi 0, %s144
      %s147 = sphi 0, %s146
      %s161 = sphi 0, %s147
      %s165 = sphi 0, %s165
      %s167 = sphi 0, %s165
      %s168 = sphi 0, %s167
      %s182 = sphi 0, %s168
      %s188 = sphi 0, %s190
      %s191 = sphi 0, %s188
      %s192 = sphi 0, %s191
      %s208 = sphi 0, %s192
    $region4: #{tpu_custom_call.1} parent=1 // loop_header_branch
      %24 = sbr.rel (%p22) target = $region8
    $region5: #{tpu_custom_call.1} parent=1 // loop_body
      %s26 = ssub.s32 %s21, 1
      %s27 = ssub.s32 %s21, 2
      %s28 = sadd.s32 %s21, 1
      %s29 = ssub.s32 %s21, %s28
      %p30 = scmp.eq.s32.totalorder %s29, 0
      %s32 = sadd.s32 %s31, 1
      %s33 = scalar_select %p30, %s31, %s32
      %p36 = pneg %p30
      %p37 = scmp.eq.s32.totalorder %s21, 1
      %p38 = por %p36, %p37
      %p39 = scmp.ne.s32.totalorder %s31, %s34
      %p40 = scmp.eq.s32.totalorder %s21, 0
      %p41 = por %p39, %p40
      %p42 = scmp.ne.s32.totalorder %s31, %s34
      %p43 = scmp.eq.s32.totalorder %s26, 1
      %p44 = por %p42, %p43
      %p45 = scmp.ne.s32.totalorder %s34, %s35
      %p46 = scmp.eq.s32.totalorder %s26, 0
      %p47 = por %p45, %p46
      %p48 = scmp.ne.s32.totalorder %s34, %s35
      %p49 = scmp.eq.s32.totalorder %s27, 1
      %p50 = por %p48, %p49
      %p52 = scmp.ne.s32.totalorder %s35, %s51
      %p53 = scmp.eq.s32.totalorder %s27, 0
      %p54 = por %p52, %p53
      %s56 = sadd.s32 %s55, 1
      %p59 = scmp.eq.s32.totalorder %s21, 1
      %p60 = scmp.ne.s32.totalorder %s55, %s57
      %p61 = scmp.eq.s32.totalorder %s21, 0
      %p62 = por %p60, %p61
      %p63 = scmp.ne.s32.totalorder %s55, %s57
      %p64 = scmp.eq.s32.totalorder %s26, 1
      %p65 = por %p63, %p64
      %p66 = scmp.ne.s32.totalorder %s57, %s58
      %p67 = scmp.eq.s32.totalorder %s26, 0
      %p68 = por %p66, %p67
      %p69 = scmp.ne.s32.totalorder %s57, %s58
      %p70 = scmp.eq.s32.totalorder %s27, 1
      %p71 = por %p69, %p70
      %p73 = scmp.ne.s32.totalorder %s58, %s72
      %p74 = scmp.eq.s32.totalorder %s27, 0
      %p75 = por %p73, %p74
      %s76 = ssub.s32 %s21, %s28
      %p77 = scmp.eq.s32.totalorder %s76, 0
      %s79 = sadd.s32 %s78, 1
      %s80 = scalar_select %p77, %s78, %s79
      %p83 = pneg %p77
      %p84 = scmp.eq.s32.totalorder %s21, 1
      %p85 = por %p83, %p84
      %p86 = scmp.ne.s32.totalorder %s78, %s81
      %p87 = scmp.eq.s32.totalorder %s21, 0
      %p88 = por %p86, %p87
      %p89 = scmp.ne.s32.totalorder %s78, %s81
      %p90 = scmp.eq.s32.totalorder %s26, 1
      %p91 = por %p89, %p90
      %p92 = scmp.ne.s32.totalorder %s81, %s82
      %p93 = scmp.eq.s32.totalorder %s26, 0
      %p94 = por %p92, %p93
      %p95 = scmp.ne.s32.totalorder %s81, %s82
      %p96 = scmp.eq.s32.totalorder %s27, 1
      %p97 = por %p95, %p96
      %p99 = scmp.ne.s32.totalorder %s82, %s98
      %p100 = scmp.eq.s32.totalorder %s27, 0
      %p101 = por %p99, %p100
      %s103 = sadd.s32 %s102, 1
      %p106 = scmp.eq.s32.totalorder %s21, 1
      %p107 = scmp.ne.s32.totalorder %s102, %s104
      %p108 = scmp.eq.s32.totalorder %s21, 0
      %p109 = por %p107, %p108
      %p110 = scmp.ne.s32.totalorder %s102, %s104
      %p111 = scmp.eq.s32.totalorder %s26, 1
      %p112 = por %p110, %p111
      %p113 = scmp.ne.s32.totalorder %s104, %s105
      %p114 = scmp.eq.s32.totalorder %s26, 0
      %p115 = por %p113, %p114
      %p116 = scmp.ne.s32.totalorder %s104, %s105
      %p117 = scmp.eq.s32.totalorder %s27, 1
      %p118 = por %p116, %p117
      %p120 = scmp.ne.s32.totalorder %s105, %s119
      %p121 = scmp.eq.s32.totalorder %s27, 0
      %p122 = por %p120, %p121
      %s124 = sadd.s32 %s123, 1
      %p127 = scmp.eq.s32.totalorder %s21, 1
      %p128 = scmp.ne.s32.totalorder %s123, %s125
      %p129 = scmp.eq.s32.totalorder %s21, 0
      %p130 = por %p128, %p129
      %p131 = scmp.ne.s32.totalorder %s123, %s125
      %p132 = scmp.eq.s32.totalorder %s26, 1
      %p133 = por %p131, %p132
      %p134 = scmp.ne.s32.totalorder %s125, %s126
      %p135 = scmp.eq.s32.totalorder %s26, 0
      %p136 = por %p134, %p135
      %p137 = scmp.ne.s32.totalorder %s125, %s126
      %p138 = scmp.eq.s32.totalorder %s27, 1
      %p139 = por %p137, %p138
      %p141 = scmp.ne.s32.totalorder %s126, %s140
      %p142 = scmp.eq.s32.totalorder %s27, 0
      %p143 = por %p141, %p142
      %s145 = sadd.s32 %s144, 1
      %p148 = scmp.eq.s32.totalorder %s21, 1
      %p149 = scmp.ne.s32.totalorder %s144, %s146
      %p150 = scmp.eq.s32.totalorder %s21, 0
      %p151 = por %p149, %p150
      %p152 = scmp.ne.s32.totalorder %s144, %s146
      %p153 = scmp.eq.s32.totalorder %s26, 1
      %p154 = por %p152, %p153
      %p155 = scmp.ne.s32.totalorder %s146, %s147
      %p156 = scmp.eq.s32.totalorder %s26, 0
      %p157 = por %p155, %p156
      %p158 = scmp.ne.s32.totalorder %s146, %s147
      %p159 = scmp.eq.s32.totalorder %s27, 1
      %p160 = por %p158, %p159
      %p162 = scmp.ne.s32.totalorder %s147, %s161
      %p163 = scmp.eq.s32.totalorder %s27, 0
      %p164 = por %p162, %p163
      %s166 = sadd.s32 %s165, 1
      %p169 = scmp.eq.s32.totalorder %s21, 1
      %p170 = scmp.ne.s32.totalorder %s165, %s167
      %p171 = scmp.eq.s32.totalorder %s21, 0
      %p172 = por %p170, %p171
      %p173 = scmp.ne.s32.totalorder %s165, %s167
      %p174 = scmp.eq.s32.totalorder %s26, 1
      %p175 = por %p173, %p174
      %p176 = scmp.ne.s32.totalorder %s167, %s168
      %p177 = scmp.eq.s32.totalorder %s26, 0
      %p178 = por %p176, %p177
      %p179 = scmp.ne.s32.totalorder %s167, %s168
      %p180 = scmp.eq.s32.totalorder %s27, 1
      %p181 = por %p179, %p180
      %p183 = scmp.ne.s32.totalorder %s168, %s182
      %p184 = scmp.eq.s32.totalorder %s27, 0
      %p185 = por %p183, %p184
      %s186 = ssub.s32 %s21, %s28
      %p187 = scmp.eq.s32.totalorder %s186, 0
      %s189 = sadd.s32 %s188, 1
      %s190 = scalar_select %p187, %s188, %s189
      %p193 = pneg %p187
      %p194 = scmp.eq.s32.totalorder %s21, 1
      %p195 = por %p193, %p194
      %p196 = scmp.ne.s32.totalorder %s188, %s191
      %p197 = scmp.eq.s32.totalorder %s21, 0
      %p198 = por %p196, %p197
      %p199 = scmp.ne.s32.totalorder %s188, %s191
      %p200 = scmp.eq.s32.totalorder %s26, 1
      %p201 = por %p199, %p200
      %p202 = scmp.ne.s32.totalorder %s191, %s192
      %p203 = scmp.eq.s32.totalorder %s26, 0
      %p204 = por %p202, %p203
      %p205 = scmp.ne.s32.totalorder %s191, %s192
      %p206 = scmp.eq.s32.totalorder %s27, 1
      %p207 = por %p205, %p206
      %p209 = scmp.ne.s32.totalorder %s192, %s208
      %p210 = scmp.eq.s32.totalorder %s27, 0
      %p211 = por %p209, %p210
      %p212 = scmp.le.s32.totalorder 1, %s21
      %p213 = scmp.lt.s32.totalorder %s21, 3
      %p214 = pnand %p212, %p213
      %p215 = pneg %p214
      // Predicated region
      $region9: #{tpu_custom_call.1} parent=5 // pred_check
        _
      $region10: #{tpu_custom_call.1} parent=5 // pred_check_branch
        %217 = sbr.rel (%p214) target = $region12
      $region11: #{tpu_custom_call.1} parent=5 // pred_region
        %s218 = ssub.s32 %s21, 1
        // Predicated region
        $region13: #{tpu_custom_call.1} parent=11 // pred_check
          %p219 = pneg %p68
        $region14: #{tpu_custom_call.1} parent=11 // pred_check_branch
          %221 = sbr.rel (%p219) target = $region16
        $region15: #{tpu_custom_call.1} parent=11 // pred_region
          %223 = vsyncadd [#allocation6], 0
          %s224 = sshll.u32 %s1, 4
          %s225 = int_to_ptr.hbm [resolvable:$true] %s224
          %s226 = sshll.u32 [#allocation5], 4
          %s227 = int_to_ptr.vmem [resolvable:$true] %s226
          %232 = dma.hbm_to_vmem [thread:$0]  %s225, 1024, %s227, [#allocation6], 64, 64, 4
        $region16: #{tpu_custom_call.1} parent=11 // pred_fallthru
          _
        // Predicated region
        $region17: #{tpu_custom_call.1} parent=11 // pred_check
          %p233 = pneg %p115
        $region18: #{tpu_custom_call.1} parent=11 // pred_check_branch
          %235 = sbr.rel (%p233) target = $region20
        $region19: #{tpu_custom_call.1} parent=11 // pred_region
          %237 = vsyncadd [#allocation6], 0
          %s238 = sshll.u32 %s3, 4
          %s239 = int_to_ptr.hbm [resolvable:$true] %s238
          %s240 = sshll.u32 [#allocation8], 4
          %s241 = int_to_ptr.vmem [resolvable:$true] %s240
          %246 = dma.hbm_to_vmem [thread:$0]  %s239, 3072, %s241, [#allocation6], 192, 192, 12
        $region20: #{tpu_custom_call.1} parent=11 // pred_fallthru
          _
        // Predicated region
        $region21: #{tpu_custom_call.1} parent=11 // pred_check
          %p247 = pneg %p136
        $region22: #{tpu_custom_call.1} parent=11 // pred_check_branch
          %249 = sbr.rel (%p247) target = $region24
        $region23: #{tpu_custom_call.1} parent=11 // pred_region
          %251 = vsyncadd [#allocation10], 0
          %s252 = sshll.u32 %s4, 4
          %s253 = int_to_ptr.hbm [resolvable:$true] %s252
          %s254 = sshll.u32 [#allocation9], 4
          %s255 = int_to_ptr.vmem [resolvable:$true] %s254
          %260 = dma.hbm_to_vmem [thread:$0]  %s253, 2048, %s255, [#allocation10], 128, 128, 8
        $region24: #{tpu_custom_call.1} parent=11 // pred_fallthru
          _
        // Predicated region
        $region25: #{tpu_custom_call.1} parent=11 // pred_check
          %p261 = pneg %p157
        $region26: #{tpu_custom_call.1} parent=11 // pred_check_branch
          %263 = sbr.rel (%p261) target = $region28
        $region27: #{tpu_custom_call.1} parent=11 // pred_region
          %265 = vsyncadd [#allocation10], 0
          %s266 = sshll.u32 %s5, 4
          %s267 = int_to_ptr.hbm [resolvable:$true] %s266
          %s268 = sshll.u32 [#allocation11], 4
          %s269 = int_to_ptr.vmem [resolvable:$true] %s268
          %274 = dma.hbm_to_vmem [thread:$0]  %s267, 1024, %s269, [#allocation10], 64, 64, 4
        $region28: #{tpu_custom_call.1} parent=11 // pred_fallthru
          _
        // Predicated region
        $region29: #{tpu_custom_call.1} parent=11 // pred_check
          %p275 = pneg %p178
        $region30: #{tpu_custom_call.1} parent=11 // pred_check_branch
          %277 = sbr.rel (%p275) target = $region32
        $region31: #{tpu_custom_call.1} parent=11 // pred_region
          _
        $region32: #{tpu_custom_call.1} parent=11 // pred_fallthru
          _
      $region12: #{tpu_custom_call.1} parent=5 // pred_fallthru
        _
      %p278 = scmp.lt.s32.totalorder %s21, 2
      // Predicated region
      $region33: #{tpu_custom_call.1} parent=5 // pred_check
        %p279 = pneg %p278
      $region34: #{tpu_custom_call.1} parent=5 // pred_check_branch
        %281 = sbr.rel (%p279) target = $region36
      $region35: #{tpu_custom_call.1} parent=5 // pred_region
        // Predicated region
        $region37: #{tpu_custom_call.1} parent=35 // pred_check
          %p282 = pneg %p41
        $region38: #{tpu_custom_call.1} parent=35 // pred_check_branch
          %284 = sbr.rel (%p282) target = $region40
        $region39: #{tpu_custom_call.1} parent=35 // pred_region
          %s285 = sand.u32 %s21, 1
          %s286 = scalar_lea.sflag [#allocation3], %s285
          %s287 = sand.u32 %s31, 1
          %s288 = smul.addr %s287, 4
          %s289 = scalar_lea.vmem [#allocation2], %s288
          %291 = vsyncadd %s286, 0
          %s292 = smul.addr %s21, 4
          %s293 = scalar_lea.hbm %s0, %s292
          %s295 = sshll.u32 %s293, 4
          %s296 = int_to_ptr.hbm [resolvable:$true] %s295
          %s297 = sshll.u32 %s289, 4
          %s298 = int_to_ptr.vmem [resolvable:$true] %s297
          %300 = dma.hbm_to_vmem [thread:$0]  %s296, 64, %s298, %s286
        $region40: #{tpu_custom_call.1} parent=35 // pred_fallthru
          _
        // Predicated region
        $region41: #{tpu_custom_call.1} parent=35 // pred_check
          %p301 = pneg %p88
        $region42: #{tpu_custom_call.1} parent=35 // pred_check_branch
          %303 = sbr.rel (%p301) target = $region44
        $region43: #{tpu_custom_call.1} parent=35 // pred_region
          %s304 = sand.u32 %s21, 1
          %s305 = scalar_lea.sflag [#allocation3], %s304
          %s306 = sand.u32 %s78, 1
          %s307 = smul.addr %s306, 8
          %s308 = scalar_lea.vmem [#allocation7], %s307
          %310 = vsyncadd %s305, 0
          %s311 = smul.addr %s21, 8
          %s312 = scalar_lea.hbm %s2, %s311
          %s314 = sshll.u32 %s312, 4
          %s315 = int_to_ptr.hbm [resolvable:$true] %s314
          %s316 = sshll.u32 %s308, 4
          %s317 = int_to_ptr.vmem [resolvable:$true] %s316
          %319 = dma.hbm_to_vmem [thread:$0]  %s315, 128, %s317, %s305
        $region44: #{tpu_custom_call.1} parent=35 // pred_fallthru
          _
      $region36: #{tpu_custom_call.1} parent=5 // pred_fallthru
        _
      %p320 = scmp.le.s32.totalorder 1, %s21
      %p321 = scmp.lt.s32.totalorder %s21, 3
      %p322 = pnand %p320, %p321
      %p323 = pneg %p322
      // Predicated region
      $region45: #{tpu_custom_call.1} parent=5 // pred_check
        _
      $region46: #{tpu_custom_call.1} parent=5 // pred_check_branch
        %325 = sbr.rel (%p322) target = $region48
      $region47: #{tpu_custom_call.1} parent=5 // pred_region
        %s326 = ssub.s32 %s21, 1
        %s327 = sand.u32 %s26, 1
        %s328 = scalar_lea.sflag [#allocation3], %s327
        %s329 = sand.u32 %s34, 1
        %s330 = smul.addr %s329, 4
        %s331 = scalar_lea.vmem [#allocation2], %s330
        // Predicated region
        $region49: #{tpu_custom_call.1} parent=47 // pred_check
          %p332 = pneg %p47
        $region50: #{tpu_custom_call.1} parent=47 // pred_check_branch
          %334 = sbr.rel (%p332) target = $region52
        $region51: #{tpu_custom_call.1} parent=47 // pred_region
          %336 = dma.done %s328, 64
        $region52: #{tpu_custom_call.1} parent=47 // pred_fallthru
          _
        // Predicated region
        $region53: #{tpu_custom_call.1} parent=47 // pred_check
          %p337 = pneg %p68
        $region54: #{tpu_custom_call.1} parent=47 // pred_check_branch
          %339 = sbr.rel (%p337) target = $region56
        $region55: #{tpu_custom_call.1} parent=47 // pred_region
          %341 = dma.done [#allocation6], 1024
        $region56: #{tpu_custom_call.1} parent=47 // pred_fallthru
          _
        %s342 = sand.u32 %s26, 1
        %s343 = scalar_lea.sflag [#allocation3], %s342
        %s344 = sand.u32 %s81, 1
        %s345 = smul.addr %s344, 8
        %s346 = scalar_lea.vmem [#allocation7], %s345
        // Predicated region
        $region57: #{tpu_custom_call.1} parent=47 // pred_check
          %p347 = pneg %p94
        $region58: #{tpu_custom_call.1} parent=47 // pred_check_branch
          %349 = sbr.rel (%p347) target = $region60
        $region59: #{tpu_custom_call.1} parent=47 // pred_region
          %351 = dma.done %s343, 128
        $region60: #{tpu_custom_call.1} parent=47 // pred_fallthru
          _
        // Predicated region
        $region61: #{tpu_custom_call.1} parent=47 // pred_check
          %p352 = pneg %p115
        $region62: #{tpu_custom_call.1} parent=47 // pred_check_branch
          %354 = sbr.rel (%p352) target = $region64
        $region63: #{tpu_custom_call.1} parent=47 // pred_region
          %356 = dma.done [#allocation6], 3072
        $region64: #{tpu_custom_call.1} parent=47 // pred_fallthru
          _
        // Predicated region
        $region65: #{tpu_custom_call.1} parent=47 // pred_check
          %p357 = pneg %p136
        $region66: #{tpu_custom_call.1} parent=47 // pred_check_branch
          %359 = sbr.rel (%p357) target = $region68
        $region67: #{tpu_custom_call.1} parent=47 // pred_region
          %361 = dma.done [#allocation10], 2048
        $region68: #{tpu_custom_call.1} parent=47 // pred_fallthru
          _
        // Predicated region
        $region69: #{tpu_custom_call.1} parent=47 // pred_check
          %p362 = pneg %p157
        $region70: #{tpu_custom_call.1} parent=47 // pred_check_branch
          %364 = sbr.rel (%p362) target = $region72
        $region71: #{tpu_custom_call.1} parent=47 // pred_region
          %366 = dma.done [#allocation10], 1024
        $region72: #{tpu_custom_call.1} parent=47 // pred_fallthru
          _
        %s367 = sand.u32 %s26, 1
        %s368 = scalar_lea.sflag [#allocation3], %s367
        %s369 = sand.u32 %s34, 1
        %s370 = smul.addr %s369, 4
        %s371 = scalar_lea.vmem [#allocation2], %s370
        %p372 = pneg %p47
        %p373 = pneg %p44
        %p374 = pneg %p68
        %p375 = pneg %p65
        %s376 = sand.u32 %s26, 1
        %s377 = scalar_lea.sflag [#allocation3], %s376
        %s378 = sand.u32 %s81, 1
        %s379 = smul.addr %s378, 8
        %s380 = scalar_lea.vmem [#allocation7], %s379
        %p381 = pneg %p94
        %p382 = pneg %p91
        %p383 = pneg %p115
        %p384 = pneg %p112
        %p385 = pneg %p136
        %p386 = pneg %p133
        %p387 = pneg %p157
        %p388 = pneg %p154
        %p389 = pneg %p178
        %p390 = pneg %p175
        %p391 = pneg %p204
        %p392 = pneg %p201
        %s393 = sand.u32 %s191, 1
        %s394 = scalar_lea.sflag [#allocation4], %s393
        %s395 = sand.u32 %s191, 1
        %s396 = smul.addr %s395, 8
        %s397 = scalar_lea.vmem [#allocation12], %s396
        %v398 = vld [vmem:[%s331] sm:$0xf]
        %v399 = vld [vmem:[#allocation5] sm:$0xf]
        %v400 = vld [vmem:[#allocation5 + $0x4] sm:$0xf]
        %v401 = vld [vmem:[#allocation5 + $0x8] sm:$0xf]
        %v402 = vld [vmem:[#allocation5 + $0xc] sm:$0xf]
        %v403 = vld [vmem:[#allocation5 + $0x10] sm:$0xf]
        %v404 = vld [vmem:[#allocation5 + $0x14] sm:$0xf]
        %v405 = vld [vmem:[#allocation5 + $0x18] sm:$0xf]
        %v406 = vld [vmem:[#allocation5 + $0x1c] sm:$0xf]
        %v407 = vld [vmem:[#allocation5 + $0x20] sm:$0xf]
        %v408 = vld [vmem:[#allocation5 + $0x24] sm:$0xf]
        %v409 = vld [vmem:[#allocation5 + $0x28] sm:$0xf]
        %v410 = vld [vmem:[#allocation5 + $0x2c] sm:$0xf]
        %v411 = vld [vmem:[#allocation5 + $0x30] sm:$0xf]
        %v412 = vld [vmem:[#allocation5 + $0x34] sm:$0xf]
        %v413 = vld [vmem:[#allocation5 + $0x38] sm:$0xf]
        %v414 = vld [vmem:[#allocation5 + $0x3c] sm:$0xf]
        %v431 = vunpack.c.l.b16 %v399
        %v432 = vunpack.c.l.b16 %v400
        %v433 = vunpack.c.l.b16 %v401
        %v434 = vunpack.c.l.b16 %v402
        %v435 = vunpack.c.l.b16 %v403
        %v436 = vunpack.c.l.b16 %v404
        %v437 = vunpack.c.l.b16 %v405
        %v438 = vunpack.c.l.b16 %v406
        %v439 = vunpack.c.l.b16 %v407
        %v440 = vunpack.c.l.b16 %v408
        %v441 = vunpack.c.l.b16 %v409
        %v442 = vunpack.c.l.b16 %v410
        %v443 = vunpack.c.l.b16 %v411
        %v444 = vunpack.c.l.b16 %v412
        %v445 = vunpack.c.l.b16 %v413
        %v446 = vunpack.c.l.b16 %v414
        %v447 = vpack.c.b16 %v432, %v431
        %v448 = vpack.c.b16 %v434, %v433
        %v449 = vpack.c.b16 %v436, %v435
        %v450 = vpack.c.b16 %v438, %v437
        %v451 = vpack.c.b16 %v440, %v439
        %v452 = vpack.c.b16 %v442, %v441
        %v453 = vpack.c.b16 %v444, %v443
        %v454 = vpack.c.b16 %v446, %v445
        %463 = vmatpush.bf16.msra.mxu0 %v454
        %464 = vmatpush.bf16.msra.mxu0 %v453
        %465 = vmatpush.bf16.msra.mxu0 %v452
        %466 = vmatpush.bf16.msra.mxu0 %v451
        %467 = vmatpush.bf16.msra.mxu0 %v450
        %468 = vmatpush.bf16.msra.mxu0 %v449
        %469 = vmatpush.bf16.msra.mxu0 %v448
        %470 = vmatpush.bf16.msra.mxu0 %v447
        %471 = vmatmul.bf16.gmra.mxu0 %v398
        %v472 = vpop.f32.mrf.mxu0
        %v473 = vadd.f32 0.0, %v472
        %v474 = vpop.f32.mrf.mxu0
        %475 = vdwg.mxu0
        %v476 = vpack.c.bf16 %v473, %v473
        %v477 = vld [vmem:[#allocation8] sm:$0xff]
        %v478 = vld [vmem:[#allocation8 + $0x8] sm:$0xf]
        %v479 = vld [vmem:[#allocation8 + $0xc] sm:$0xff]
        %v480 = vld [vmem:[#allocation8 + $0x14] sm:$0xf]
        %v481 = vld [vmem:[#allocation8 + $0x18] sm:$0xff]
        %v482 = vld [vmem:[#allocation8 + $0x20] sm:$0xf]
        %v483 = vld [vmem:[#allocation8 + $0x24] sm:$0xff]
        %v484 = vld [vmem:[#allocation8 + $0x2c] sm:$0xf]
        %v485 = vld [vmem:[#allocation8 + $0x30] sm:$0xff]
        %v486 = vld [vmem:[#allocation8 + $0x38] sm:$0xf]
        %v487 = vld [vmem:[#allocation8 + $0x3c] sm:$0xff]
        %v488 = vld [vmem:[#allocation8 + $0x44] sm:$0xf]
        %v489 = vld [vmem:[#allocation8 + $0x48] sm:$0xff]
        %v490 = vld [vmem:[#allocation8 + $0x50] sm:$0xf]
        %v491 = vld [vmem:[#allocation8 + $0x54] sm:$0xff]
        %v492 = vld [vmem:[#allocation8 + $0x5c] sm:$0xf]
        %v493 = vld [vmem:[#allocation8 + $0x60] sm:$0xff]
        %v494 = vld [vmem:[#allocation8 + $0x68] sm:$0xf]
        %v495 = vld [vmem:[#allocation8 + $0x6c] sm:$0xff]
        %v496 = vld [vmem:[#allocation8 + $0x74] sm:$0xf]
        %v497 = vld [vmem:[#allocation8 + $0x78] sm:$0xff]
        %v498 = vld [vmem:[#allocation8 + $0x80] sm:$0xf]
        %v499 = vld [vmem:[#allocation8 + $0x84] sm:$0xff]
        %v500 = vld [vmem:[#allocation8 + $0x8c] sm:$0xf]
        %v501 = vld [vmem:[#allocation8 + $0x90] sm:$0xff]
        %v502 = vld [vmem:[#allocation8 + $0x98] sm:$0xf]
        %v503 = vld [vmem:[#allocation8 + $0x9c] sm:$0xff]
        %v504 = vld [vmem:[#allocation8 + $0xa4] sm:$0xf]
        %v505 = vld [vmem:[#allocation8 + $0xa8] sm:$0xff]
        %v506 = vld [vmem:[#allocation8 + $0xb0] sm:$0xf]
        %v507 = vld [vmem:[#allocation8 + $0xb4] sm:$0xff]
        %v508 = vld [vmem:[#allocation8 + $0xbc] sm:$0xf]
        %v509 = vld [vmem:[%s6] sm:$0x7]
        %v511 = vperm.slane %v509, 0
        %v512 = vperm.slane %v509, 1
        %v513 = vperm.slane %v509, 2
        %v549 = vunpack.c.l.b16 %v477
        %v550 = vunpack.c.h.b16 %v477
        %v551 = vunpack.c.l.b16 %v478
        %v552 = vunpack.c.l.b16 %v479
        %v553 = vunpack.c.h.b16 %v479
        %v554 = vunpack.c.l.b16 %v480
        %v555 = vunpack.c.l.b16 %v481
        %v556 = vunpack.c.h.b16 %v481
        %v557 = vunpack.c.l.b16 %v482
        %v558 = vunpack.c.l.b16 %v483
        %v559 = vunpack.c.h.b16 %v483
        %v560 = vunpack.c.l.b16 %v484
        %v561 = vunpack.c.l.b16 %v485
        %v562 = vunpack.c.h.b16 %v485
        %v563 = vunpack.c.l.b16 %v486
        %v564 = vunpack.c.l.b16 %v487
        %v565 = vunpack.c.h.b16 %v487
        %v566 = vunpack.c.l.b16 %v488
        %v567 = vunpack.c.l.b16 %v489
        %v568 = vunpack.c.h.b16 %v489
        %v569 = vunpack.c.l.b16 %v490
        %v570 = vunpack.c.l.b16 %v491
        %v571 = vunpack.c.h.b16 %v491
        %v572 = vunpack.c.l.b16 %v492
        %v573 = vunpack.c.l.b16 %v493
        %v574 = vunpack.c.h.b16 %v493
        %v575 = vunpack.c.l.b16 %v494
        %v576 = vunpack.c.l.b16 %v495
        %v577 = vunpack.c.h.b16 %v495
        %v578 = vunpack.c.l.b16 %v496
        %v579 = vunpack.c.l.b16 %v497
        %v580 = vunpack.c.h.b16 %v497
        %v581 = vunpack.c.l.b16 %v498
        %v582 = vunpack.c.l.b16 %v499
        %v583 = vunpack.c.h.b16 %v499
        %v584 = vunpack.c.l.b16 %v500
        %v585 = vunpack.c.l.b16 %v501
        %v586 = vunpack.c.h.b16 %v501
        %v587 = vunpack.c.l.b16 %v502
        %v588 = vunpack.c.l.b16 %v503
        %v589 = vunpack.c.h.b16 %v503
        %v590 = vunpack.c.l.b16 %v504
        %v591 = vunpack.c.l.b16 %v505
        %v592 = vunpack.c.h.b16 %v505
        %v593 = vunpack.c.l.b16 %v506
        %v594 = vunpack.c.l.b16 %v507
        %v595 = vunpack.c.h.b16 %v507
        %v596 = vunpack.c.l.b16 %v508
        %v597 = vpack.c.b16 %v552, %v549
        %v598 = vpack.c.b16 %v553, %v550
        %v599 = vpack.c.b16 %v554, %v551
        %v600 = vpack.c.b16 %v558, %v555
        %v601 = vpack.c.b16 %v559, %v556
        %v602 = vpack.c.b16 %v560, %v557
        %v603 = vpack.c.b16 %v564, %v561
        %v604 = vpack.c.b16 %v565, %v562
        %v605 = vpack.c.b16 %v566, %v563
        %v606 = vpack.c.b16 %v570, %v567
        %v607 = vpack.c.b16 %v571, %v568
        %v608 = vpack.c.b16 %v572, %v569
        %v609 = vpack.c.b16 %v576, %v573
        %v610 = vpack.c.b16 %v577, %v574
        %v611 = vpack.c.b16 %v578, %v575
        %v612 = vpack.c.b16 %v582, %v579
        %v613 = vpack.c.b16 %v583, %v580
        %v614 = vpack.c.b16 %v584, %v581
        %v615 = vpack.c.b16 %v588, %v585
        %v616 = vpack.c.b16 %v589, %v586
        %v617 = vpack.c.b16 %v590, %v587
        %v618 = vpack.c.b16 %v594, %v591
        %v619 = vpack.c.b16 %v595, %v592
        %v620 = vpack.c.b16 %v596, %v593
        %645 = vmatpush.bf16.msra.mxu0 %v618
        %646 = vmatpush.bf16.msra.mxu0 %v615
        %647 = vmatpush.bf16.msra.mxu0 %v612
        %648 = vmatpush.bf16.msra.mxu0 %v609
        %649 = vmatpush.bf16.msra.mxu0 %v606
        %650 = vmatpush.bf16.msra.mxu0 %v603
        %651 = vmatpush.bf16.msra.mxu0 %v600
        %652 = vmatpush.bf16.msra.mxu0 %v597
        %653 = vmatmul.bf16.gmra.mxu0 %v476
        %v654 = vpop.f32.mrf.mxu0
        %v655 = vadd.f32 %v511, %v654
        %v656 = vpop.f32.mrf.mxu0
        %657 = vdwg.mxu0
        %658 = vmatpush.bf16.msra.mxu0 %v619
        %659 = vmatpush.bf16.msra.mxu0 %v616
        %660 = vmatpush.bf16.msra.mxu0 %v613
        %661 = vmatpush.bf16.msra.mxu0 %v610
        %662 = vmatpush.bf16.msra.mxu0 %v607
        %663 = vmatpush.bf16.msra.mxu0 %v604
        %664 = vmatpush.bf16.msra.mxu0 %v601
        %665 = vmatpush.bf16.msra.mxu0 %v598
        %666 = vmatmul.bf16.gmra.mxu0 %v476
        %v667 = vpop.f32.mrf.mxu0
        %v668 = vadd.f32 %v512, %v667
        %v669 = vpop.f32.mrf.mxu0
        %670 = vdwg.mxu0
        %671 = vmatpush.bf16.msra.mxu0 %v620
        %672 = vmatpush.bf16.msra.mxu0 %v617
        %673 = vmatpush.bf16.msra.mxu0 %v614
        %674 = vmatpush.bf16.msra.mxu0 %v611
        %675 = vmatpush.bf16.msra.mxu0 %v608
        %676 = vmatpush.bf16.msra.mxu0 %v605
        %677 = vmatpush.bf16.msra.mxu0 %v602
        %678 = vmatpush.bf16.msra.mxu0 %v599
        %679 = vmatmul.bf16.gmra.mxu0 %v476
        %v680 = vpop.f32.mrf.mxu0
        %v681 = vadd.f32 %v513, %v680
        %v682 = vpop.f32.mrf.mxu0
        %683 = vdwg.mxu0
        %v684 = vld [vmem:[%s346] sm:$0xff]
        %v685 = vpack.c.bf16 %v684, %v684
        %v686 = vld [vmem:[#allocation9] sm:$0xff]
        %v687 = vld [vmem:[#allocation9 + $0x8] sm:$0xff]
        %v688 = vld [vmem:[#allocation9 + $0x10] sm:$0xff]
        %v689 = vld [vmem:[#allocation9 + $0x18] sm:$0xff]
        %v690 = vld [vmem:[#allocation9 + $0x20] sm:$0xff]
        %v691 = vld [vmem:[#allocation9 + $0x28] sm:$0xff]
        %v692 = vld [vmem:[#allocation9 + $0x30] sm:$0xff]
        %v693 = vld [vmem:[#allocation9 + $0x38] sm:$0xff]
        %v694 = vld [vmem:[#allocation9 + $0x40] sm:$0xff]
        %v695 = vld [vmem:[#allocation9 + $0x48] sm:$0xff]
        %v696 = vld [vmem:[#allocation9 + $0x50] sm:$0xff]
        %v697 = vld [vmem:[#allocation9 + $0x58] sm:$0xff]
        %v698 = vld [vmem:[#allocation9 + $0x60] sm:$0xff]
        %v699 = vld [vmem:[#allocation9 + $0x68] sm:$0xff]
        %v700 = vld [vmem:[#allocation9 + $0x70] sm:$0xff]
        %v701 = vld [vmem:[#allocation9 + $0x78] sm:$0xff]
        %v718 = vunpack.c.l.b16 %v686
        %v719 = vunpack.c.h.b16 %v686
        %v720 = vunpack.c.l.b16 %v687
        %v721 = vunpack.c.h.b16 %v687
        %v722 = vunpack.c.l.b16 %v688
        %v723 = vunpack.c.h.b16 %v688
        %v724 = vunpack.c.l.b16 %v689
        %v725 = vunpack.c.h.b16 %v689
        %v726 = vunpack.c.l.b16 %v690
        %v727 = vunpack.c.h.b16 %v690
        %v728 = vunpack.c.l.b16 %v691
        %v729 = vunpack.c.h.b16 %v691
        %v730 = vunpack.c.l.b16 %v692
        %v731 = vunpack.c.h.b16 %v692
        %v732 = vunpack.c.l.b16 %v693
        %v733 = vunpack.c.h.b16 %v693
        %v734 = vunpack.c.l.b16 %v694
        %v735 = vunpack.c.h.b16 %v694
        %v736 = vunpack.c.l.b16 %v695
        %v737 = vunpack.c.h.b16 %v695
        %v738 = vunpack.c.l.b16 %v696
        %v739 = vunpack.c.h.b16 %v696
        %v740 = vunpack.c.l.b16 %v697
        %v741 = vunpack.c.h.b16 %v697
        %v742 = vunpack.c.l.b16 %v698
        %v743 = vunpack.c.h.b16 %v698
        %v744 = vunpack.c.l.b16 %v699
        %v745 = vunpack.c.h.b16 %v699
        %v746 = vunpack.c.l.b16 %v700
        %v747 = vunpack.c.h.b16 %v700
        %v748 = vunpack.c.l.b16 %v701
        %v749 = vunpack.c.h.b16 %v701
        %v750 = vpack.c.b16 %v720, %v718
        %v751 = vpack.c.b16 %v721, %v719
        %v752 = vpack.c.b16 %v724, %v722
        %v753 = vpack.c.b16 %v725, %v723
        %v754 = vpack.c.b16 %v728, %v726
        %v755 = vpack.c.b16 %v729, %v727
        %v756 = vpack.c.b16 %v732, %v730
        %v757 = vpack.c.b16 %v733, %v731
        %v758 = vpack.c.b16 %v736, %v734
        %v759 = vpack.c.b16 %v737, %v735
        %v760 = vpack.c.b16 %v740, %v738
        %v761 = vpack.c.b16 %v741, %v739
        %v762 = vpack.c.b16 %v744, %v742
        %v763 = vpack.c.b16 %v745, %v743
        %v764 = vpack.c.b16 %v748, %v746
        %v765 = vpack.c.b16 %v749, %v747
        %782 = vmatpush.bf16.msra.mxu0 %v764
        %783 = vmatpush.bf16.msra.mxu0 %v762
        %784 = vmatpush.bf16.msra.mxu0 %v760
        %785 = vmatpush.bf16.msra.mxu0 %v758
        %786 = vmatpush.bf16.msra.mxu0 %v756
        %787 = vmatpush.bf16.msra.mxu0 %v754
        %788 = vmatpush.bf16.msra.mxu0 %v752
        %789 = vmatpush.bf16.msra.mxu0 %v750
        %790 = vmatmul.bf16.gmra.mxu0 %v685
        %v791 = vpop.f32.mrf.mxu0
        %v792 = vadd.f32 0.0, %v791
        %v793 = vpop.f32.mrf.mxu0
        %794 = vdwg.mxu0
        %795 = vmatpush.bf16.msra.mxu0 %v765
        %796 = vmatpush.bf16.msra.mxu0 %v763
        %797 = vmatpush.bf16.msra.mxu0 %v761
        %798 = vmatpush.bf16.msra.mxu0 %v759
        %799 = vmatpush.bf16.msra.mxu0 %v757
        %800 = vmatpush.bf16.msra.mxu0 %v755
        %801 = vmatpush.bf16.msra.mxu0 %v753
        %802 = vmatpush.bf16.msra.mxu0 %v751
        %803 = vmatmul.bf16.gmra.mxu0 %v685
        %v804 = vpop.f32.mrf.mxu0
        %v805 = vadd.f32 0.0, %v804
        %v806 = vpop.f32.mrf.mxu0
        %807 = vdwg.mxu0
        %v808 = vadd.f32 %v655, %v792
        %v809 = vxor.u32 %v808, 2147483648
        %v810 = vmul.f32 %v809, 1.442695
        %v811 = vpow.pop %v810
        %v812 = vadd.f32 %v811, 1.0
        %v813 = vrcp.pop %v812
        %v814 = vmul.f32 %v812, %v813
        %v815 = vsub.f32 1.0, %v814
        %v816 = vmul.f32 %v813, %v815
        %v817 = vadd.f32 %v813, %v816
        %vm818 = vweird.f32 %v812
        %vm819 = vweird.f32 %v813
        %vm820 = vmor %vm818, %vm819
        %v821 = vsel %vm820, %v813, %v817
        %v822 = vand.u32 2147483647, %v812
        %vm823 = vcmp.eq.f32.partialorder %v822, 8.507059e+37
        %v824 = vand.u32 %v812, 2147483648
        %v825 = vor.u32 1.1754944e-38, %v824
        %v826 = vsel %vm823, %v825, %v821
        %v827 = vmul.f32 1.0, %v826
        %v828 = vadd.f32 %v668, %v805
        %v829 = vxor.u32 %v828, 2147483648
        %v830 = vmul.f32 %v829, 1.442695
        %v831 = vpow.pop %v830
        %v832 = vadd.f32 %v831, 1.0
        %v833 = vrcp.pop %v832
        %v834 = vmul.f32 %v832, %v833
        %v835 = vsub.f32 1.0, %v834
        %v836 = vmul.f32 %v833, %v835
        %v837 = vadd.f32 %v833, %v836
        %vm838 = vweird.f32 %v832
        %vm839 = vweird.f32 %v833
        %vm840 = vmor %vm838, %vm839
        %v841 = vsel %vm840, %v833, %v837
        %v842 = vand.u32 2147483647, %v832
        %vm843 = vcmp.eq.f32.partialorder %v842, 8.507059e+37
        %v844 = vand.u32 %v832, 2147483648
        %v845 = vor.u32 1.1754944e-38, %v844
        %v846 = vsel %vm843, %v845, %v841
        %v847 = vmul.f32 1.0, %v846
        %v848 = vmul.f32 %v684, %v847
        %v849 = vpack.c.bf16 %v848, %v848
        %v850 = vld [vmem:[#allocation11] sm:$0xf]
        %v851 = vld [vmem:[#allocation11 + $0x4] sm:$0xf]
        %v852 = vld [vmem:[#allocation11 + $0x8] sm:$0xf]
        %v853 = vld [vmem:[#allocation11 + $0xc] sm:$0xf]
        %v854 = vld [vmem:[#allocation11 + $0x10] sm:$0xf]
        %v855 = vld [vmem:[#allocation11 + $0x14] sm:$0xf]
        %v856 = vld [vmem:[#allocation11 + $0x18] sm:$0xf]
        %v857 = vld [vmem:[#allocation11 + $0x1c] sm:$0xf]
        %v858 = vld [vmem:[#allocation11 + $0x20] sm:$0xf]
        %v859 = vld [vmem:[#allocation11 + $0x24] sm:$0xf]
        %v860 = vld [vmem:[#allocation11 + $0x28] sm:$0xf]
        %v861 = vld [vmem:[#allocation11 + $0x2c] sm:$0xf]
        %v862 = vld [vmem:[#allocation11 + $0x30] sm:$0xf]
        %v863 = vld [vmem:[#allocation11 + $0x34] sm:$0xf]
        %v864 = vld [vmem:[#allocation11 + $0x38] sm:$0xf]
        %v865 = vld [vmem:[#allocation11 + $0x3c] sm:$0xf]
        %v882 = vunpack.c.l.b16 %v850
        %v883 = vunpack.c.l.b16 %v851
        %v884 = vunpack.c.l.b16 %v852
        %v885 = vunpack.c.l.b16 %v853
        %v886 = vunpack.c.l.b16 %v854
        %v887 = vunpack.c.l.b16 %v855
        %v888 = vunpack.c.l.b16 %v856
        %v889 = vunpack.c.l.b16 %v857
        %v890 = vunpack.c.l.b16 %v858
        %v891 = vunpack.c.l.b16 %v859
        %v892 = vunpack.c.l.b16 %v860
        %v893 = vunpack.c.l.b16 %v861
        %v894 = vunpack.c.l.b16 %v862
        %v895 = vunpack.c.l.b16 %v863
        %v896 = vunpack.c.l.b16 %v864
        %v897 = vunpack.c.l.b16 %v865
        %v898 = vpack.c.b16 %v883, %v882
        %v899 = vpack.c.b16 %v885, %v884
        %v900 = vpack.c.b16 %v887, %v886
        %v901 = vpack.c.b16 %v889, %v888
        %v902 = vpack.c.b16 %v891, %v890
        %v903 = vpack.c.b16 %v893, %v892
        %v904 = vpack.c.b16 %v895, %v894
        %v905 = vpack.c.b16 %v897, %v896
        %914 = vmatpush.bf16.msra.mxu0 %v905
        %915 = vmatpush.bf16.msra.mxu0 %v904
        %916 = vmatpush.bf16.msra.mxu0 %v903
        %917 = vmatpush.bf16.msra.mxu0 %v902
        %918 = vmatpush.bf16.msra.mxu0 %v901
        %919 = vmatpush.bf16.msra.mxu0 %v900
        %920 = vmatpush.bf16.msra.mxu0 %v899
        %921 = vmatpush.bf16.msra.mxu0 %v898
        %922 = vmatmul.bf16.gmra.mxu0 %v849
        %v923 = vpop.f32.mrf.mxu0
        %v924 = vadd.f32 0.0, %v923
        %v925 = vpop.f32.mrf.mxu0
        %926 = vdwg.mxu0
        %v927 = vadd.f32 %v681, %v924
        %v928 = vtanh.pop %v927
        %v929 = vmul.f32 %v827, %v684
        %v930 = vsub.f32 1.0, %v827
        %v931 = vmul.f32 %v930, %v928
        %v932 = vadd.f32 %v929, %v931
        %933 = vst [vmem:[%s397] sm:$0xff] %v932
        %s934 = sand.u32 %s191, 1
        %s935 = scalar_lea.sflag [#allocation4], %s934
        %s936 = sand.u32 %s191, 1
        %s937 = smul.addr %s936, 8
        %s938 = scalar_lea.vmem [#allocation12], %s937
        // Predicated region
        $region73: #{tpu_custom_call.1} parent=47 // pred_check
          %p939 = pneg %p201
        $region74: #{tpu_custom_call.1} parent=47 // pred_check_branch
          %941 = sbr.rel (%p939) target = $region76
        $region75: #{tpu_custom_call.1} parent=47 // pred_region
          %943 = vsyncadd %s935, 0
          %s944 = smul.addr %s26, 8
          %s945 = scalar_lea.hbm %s7, %s944
          %s947 = sshll.u32 %s938, 4
          %s948 = int_to_ptr.vmem [resolvable:$true] %s947
          %s949 = sshll.u32 %s945, 4
          %s950 = int_to_ptr.hbm [resolvable:$true] %s949
          %952 = dma.vmem_to_hbm [thread:$0]  %s948, 128, %s950, %s935
        $region76: #{tpu_custom_call.1} parent=47 // pred_fallthru
          _
      $region48: #{tpu_custom_call.1} parent=5 // pred_fallthru
        _
      %p953 = scmp.le.s32.totalorder 2, %s21
      // Predicated region
      $region77: #{tpu_custom_call.1} parent=5 // pred_check
        %p954 = pneg %p953
      $region78: #{tpu_custom_call.1} parent=5 // pred_check_branch
        %956 = sbr.rel (%p954) target = $region80
      $region79: #{tpu_custom_call.1} parent=5 // pred_region
        %s957 = ssub.s32 %s21, 2
        // Predicated region
        $region81: #{tpu_custom_call.1} parent=79 // pred_check
          %p958 = pneg %p207
        $region82: #{tpu_custom_call.1} parent=79 // pred_check_branch
          %960 = sbr.rel (%p958) target = $region84
        $region83: #{tpu_custom_call.1} parent=79 // pred_region
          %s961 = sand.u32 %s192, 1
          %s962 = scalar_lea.sflag [#allocation4], %s961
          %s963 = sand.u32 %s192, 1
          %s964 = smul.addr %s963, 8
          %s965 = scalar_lea.vmem [#allocation12], %s964
          %967 = dma.done %s962, 128
        $region84: #{tpu_custom_call.1} parent=79 // pred_fallthru
          _
      $region80: #{tpu_custom_call.1} parent=5 // pred_fallthru
        _
    $region6: #{tpu_custom_call.1} parent=1 // loop_footer
      %s25 = sadd.s32 1, %s21
    $region7: #{tpu_custom_call.1} parent=1 // loop_footer_branch
      %20 = sbr.rel target = $region3
    $region8: #{tpu_custom_call.1} parent=1 // loop_exit
      _
    %968 = vsyncpa [#allocation3], 1
    %s969 = scalar_lea.sflag [#allocation3], 1
    %970 = vsyncpa %s969, 1
    %971 = vsyncpa [#allocation6], 1
    %972 = vsyncpa [#allocation10], 1
    %973 = vsyncpa [#allocation4], 1
    %s974 = scalar_lea.sflag [#allocation4], 1
    %975 = vsyncpa %s974, 1

</llo_original>
